<compile_context>
chip_gen: v7x
topology: tpu7x:2x2x1
jax: 0.10.0
libtpu: 0.0.40
codegen_flags: <defaults>
</compile_context>

<pallas_src>
import jax
import jax.numpy as jnp
from jax.experimental import pallas as pl
from jax.experimental.pallas import tpu as pltpu


def _decoder_kernel(x_ref, w1_ref, b1_ref, w2_ref, b2_ref, w3_ref, b3_ref,
                    out_ref):
    # x_ref: (in_f, TB) f32 — cast to bf16 on the VPU (hides under DMA/MXU).
    x = x_ref[...].astype(jnp.bfloat16)

    # ---- Layer 1: h^T = w1^T @ x^T + b1^T ------------------- (2*in_f, TB) f32
    h = jnp.dot(w1_ref[...], x, preferred_element_type=jnp.float32) + b1_ref[...]

    # ---- Feature expansion: sublane-axis stack (no lane concat) -------------
    # Elementwise / transcendental math stays f32 (v5e VPU/EUP have no bf16).
    f = jnp.concatenate([h, h * h, jnp.sin(h), jnp.cos(h)], axis=0)  # (8*in_f, TB)

    # ---- Layer 2: single K = 8*in_f matmul + sigmoid --------- (2*out_f, TB)
    y = (jnp.dot(w2_ref[...], f.astype(jnp.bfloat16),
                 preferred_element_type=jnp.float32) + b2_ref[...])
    y = 0.5 * (jnp.tanh(0.5 * y) + 1.0)        # sigmoid via one EUP tanh

    # ---- Layer 3 + sigmoid ------------------------------------ (out_f, TB)
    z = (jnp.dot(w3_ref[...], y.astype(jnp.bfloat16),
                 preferred_element_type=jnp.float32) + b3_ref[...])
    out_ref[...] = (0.5 * (jnp.tanh(0.5 * z) + 1.0)).astype(out_ref.dtype)


def motion_embedding_decoder(x, params, block_cols=1024):
    """x: (B, in_features) float32.  params: [in, out] weights + (1, out) biases."""
    B, in_f = x.shape
    out_f = params["w3"].shape[1]
    hid1 = 2 * in_f          # first hidden width
    hid2 = 8 * in_f          # expanded feature width (matmul K)
    hid3 = 2 * out_f         # second hidden width

    # Batch lives on the lane axis: tile it in multiples of 128 lanes, aiming
    # for >= 4 grid steps (keeps both v7x TCs pipelined), capped at block_cols.
    tb = min(block_cols, max(128, (pl.cdiv(B, 4) // 128) * 128))
    n_tiles = pl.cdiv(B, tb)
    Bp = n_tiles * tb

    # Transpose so batch is the (lane-dense) last dim; pad batch to the tile.
    # x stays f32 here — the bf16 cast happens inside the kernel.
    xT = jnp.transpose(x)                                   # (in_f, B)
    if Bp != B:
        xT = jnp.pad(xT, ((0, 0), (0, Bp - B)))

    # Pre-transposed bf16 weights, f32 column biases (N, 1).  One resident w2.
    w1 = jnp.transpose(params["w1"]).astype(jnp.bfloat16)   # (hid1, in_f)
    w2 = jnp.transpose(params["w2"]).astype(jnp.bfloat16)   # (hid3, hid2)
    w3 = jnp.transpose(params["w3"]).astype(jnp.bfloat16)   # (out_f, hid3)
    b1 = jnp.transpose(params["b1"])                        # (hid1, 1) f32
    b2 = jnp.transpose(params["b2"])                        # (hid3, 1) f32
    b3 = jnp.transpose(params["b3"])                        # (out_f, 1) f32

    # Constant index_map -> the block stays VMEM-resident across all grid steps.
    resident = lambda a: pl.BlockSpec(a.shape, lambda i: (0, 0))

    cost = pl.CostEstimate(
        flops=2 * Bp * (in_f * hid1 + hid2 * hid3 + hid3 * out_f),
        transcendentals=Bp * (2 * hid1 + hid3 + out_f),      # sin+cos, tanh x2
        bytes_accessed=(xT.size * 4 + Bp * out_f * 4
                        + (w1.size + w2.size + w3.size) * 2
                        + (b1.size + b2.size + b3.size) * 4),
    )

    outT = pl.pallas_call(
        _decoder_kernel,
        out_shape=jax.ShapeDtypeStruct((out_f, Bp), jnp.float32),
        grid_spec=pltpu.PrefetchScalarGridSpec(
            num_scalar_prefetch=0,
            grid=(n_tiles,),
            in_specs=[
                pl.BlockSpec((in_f, tb), lambda i: (0, i)),   # x^T tiled over batch lanes
                resident(w1), resident(b1),
                resident(w2), resident(b2),
                resident(w3), resident(b3),
            ],
            out_specs=pl.BlockSpec((out_f, tb), lambda i: (0, i)),  # lane-dense store
        ),
        compiler_params=pltpu.CompilerParams(
            dimension_semantics=("parallel",),   # shard batch tiles across TCs (v7x)
        ),
        cost_estimate=cost,
    )(xT, w1, b1, w2, b2, w3, b3)

    return jnp.transpose(outT)[:B]


def init_params(key, in_features, out_features):
    """Deterministic synthetic parameters (nn.Linear shapes, stored transposed
    as [in, out]; biases kept as [1, out])."""
    k1, k2, k3, k4, k5, k6 = jax.random.split(key, 6)
    hid1 = 2 * in_features
    hid2 = 8 * in_features
    hid3 = 2 * out_features
    s = lambda fan_in: 1.0 / jnp.sqrt(fan_in)
    return {
        "w1": jax.random.normal(k1, (in_features, hid1), jnp.float32) * s(in_features),
        "b1": jax.random.normal(k2, (1, hid1), jnp.float32) * 0.01,
        "w2": jax.random.normal(k3, (hid2, hid3), jnp.float32) * s(hid2),
        "b2": jax.random.normal(k4, (1, hid3), jnp.float32) * 0.01,
        "w3": jax.random.normal(k5, (hid3, out_features), jnp.float32) * s(hid3),
        "b3": jax.random.normal(k6, (1, out_features), jnp.float32) * 0.01,
    }


def reference(x, p):
    """Pure-f32 reference matching the PyTorch forward."""
    h = x @ p["w1"] + p["b1"]
    f = jnp.concatenate([h, h * h, jnp.sin(h), jnp.cos(h)], axis=-1)
    y = jax.nn.sigmoid(f @ p["w2"] + p["b2"])
    return jax.nn.sigmoid(y @ p["w3"] + p["b3"])


if __name__ == "__main__":
    key = jax.random.PRNGKey(0)
    kx, kp = jax.random.split(key)

    B, in_features, out_features = 512, 32, 16     # -> tb=128, grid=(4,)
    x = jax.random.normal(kx, (B, in_features), jnp.float32)
    params = init_params(kp, in_features, out_features)

    out = motion_embedding_decoder(x, params)
    out = jax.block_until_ready(out)

    ref = reference(x, params)
    assert out.shape == (B, out_features)
    # bf16 matmul inputs with f32 accumulation: loosen tolerance vs pure-f32 ref.
    assert jnp.allclose(out, ref, atol=2e-2, rtol=2e-2), (
        float(jnp.max(jnp.abs(out - ref))))

    print("KERNEL_OK")
</pallas_src>

<mosaic_0001>
module attributes {stable_mosaic.version = 11 : i64} {
  func.func @_decoder_kernel(%arg0: i32, %arg1: memref<32x128xf32, #tpu.memory_space<vmem>>, %arg2: memref<64x32xbf16, #tpu.memory_space<vmem>>, %arg3: memref<64x1xf32, #tpu.memory_space<vmem>>, %arg4: memref<32x256xbf16, #tpu.memory_space<vmem>>, %arg5: memref<32x1xf32, #tpu.memory_space<vmem>>, %arg6: memref<16x32xbf16, #tpu.memory_space<vmem>>, %arg7: memref<16x1xf32, #tpu.memory_space<vmem>>, %arg8: memref<16x128xf32, #tpu.memory_space<vmem>>) attributes {dimension_semantics = [#tpu.dimension_semantics<parallel>], iteration_bounds = array<i64: 4>, scalar_prefetch = 0 : i64, scratch_operands = 0 : i64, tpu.core_type = #tpu.core_type<tc>, window_params = [{transform_indices = @transform_0, window_bounds = array<i64: 32, 128>}, {pipeline_mode = #tpu.pipeline_mode<synchronous>, transform_indices = @transform_1, window_bounds = array<i64: 64, 32>}, {pipeline_mode = #tpu.pipeline_mode<synchronous>, transform_indices = @transform_2, window_bounds = array<i64: 64, 1>}, {pipeline_mode = #tpu.pipeline_mode<synchronous>, transform_indices = @transform_3, window_bounds = array<i64: 32, 256>}, {pipeline_mode = #tpu.pipeline_mode<synchronous>, transform_indices = @transform_4, window_bounds = array<i64: 32, 1>}, {pipeline_mode = #tpu.pipeline_mode<synchronous>, transform_indices = @transform_5, window_bounds = array<i64: 16, 32>}, {pipeline_mode = #tpu.pipeline_mode<synchronous>, transform_indices = @transform_6, window_bounds = array<i64: 16, 1>}, {transform_indices = @transform_7, window_bounds = array<i64: 16, 128>}]} {
    %c0 = arith.constant 0 : index
    %c0_0 = arith.constant 0 : index
    %0 = vector.load %arg1[%c0, %c0_0] : memref<32x128xf32, #tpu.memory_space<vmem>>, vector<32x128xf32>
    %1 = arith.truncf %0 : vector<32x128xf32> to vector<32x128xbf16>
    %c0_1 = arith.constant 0 : index
    %c0_2 = arith.constant 0 : index
    %2 = vector.load %arg2[%c0_1, %c0_2] : memref<64x32xbf16, #tpu.memory_space<vmem>>, vector<64x32xbf16>
    %cst = arith.constant dense<0.000000e+00> : vector<64x128xf32>
    %3 = tpu.matmul %2, %1, %cst {dimension_numbers = #tpu.dot_dimension_numbers<[1], [0], [0], [1], [0, 0, 1, 1], [], []>} : vector<64x32xbf16>, vector<32x128xbf16>, vector<64x128xf32> -> vector<64x128xf32>
    %c0_3 = arith.constant 0 : index
    %c0_4 = arith.constant 0 : index
    %4 = vector.load %arg3[%c0_3, %c0_4] : memref<64x1xf32, #tpu.memory_space<vmem>>, vector<64x1xf32>
    %5 = vector.broadcast %4 : vector<64x1xf32> to vector<64x128xf32>
    %6 = arith.addf %3, %5 : vector<64x128xf32>
    %7 = arith.mulf %6, %6 : vector<64x128xf32>
    %8 = math.sin %6 : vector<64x128xf32>
    %9 = math.cos %6 : vector<64x128xf32>
    %10 = tpu.concatenate %6, %7, %8, %9 in 0 : vector<64x128xf32>, vector<64x128xf32>, vector<64x128xf32>, vector<64x128xf32> -> vector<256x128xf32>
    %c0_5 = arith.constant 0 : index
    %c0_6 = arith.constant 0 : index
    %11 = vector.load %arg4[%c0_5, %c0_6] : memref<32x256xbf16, #tpu.memory_space<vmem>>, vector<32x256xbf16>
    %12 = arith.truncf %10 : vector<256x128xf32> to vector<256x128xbf16>
    %cst_7 = arith.constant dense<0.000000e+00> : vector<32x128xf32>
    %13 = tpu.matmul %11, %12, %cst_7 {dimension_numbers = #tpu.dot_dimension_numbers<[1], [0], [0], [1], [0, 0, 1, 1], [], []>} : vector<32x256xbf16>, vector<256x128xbf16>, vector<32x128xf32> -> vector<32x128xf32>
    %c0_8 = arith.constant 0 : index
    %c0_9 = arith.constant 0 : index
    %14 = vector.load %arg5[%c0_8, %c0_9] : memref<32x1xf32, #tpu.memory_space<vmem>>, vector<32x1xf32>
    %15 = vector.broadcast %14 : vector<32x1xf32> to vector<32x128xf32>
    %16 = arith.addf %13, %15 : vector<32x128xf32>
    %cst_10 = arith.constant 5.000000e-01 : f32
    %17 = vector.broadcast %cst_10 : f32 to vector<32x128xf32>
    %18 = arith.mulf %17, %16 : vector<32x128xf32>
    %19 = math.tanh %18 : vector<32x128xf32>
    %cst_11 = arith.constant 1.000000e+00 : f32
    %20 = vector.broadcast %cst_11 : f32 to vector<32x128xf32>
    %21 = arith.addf %19, %20 : vector<32x128xf32>
    %cst_12 = arith.constant 5.000000e-01 : f32
    %22 = vector.broadcast %cst_12 : f32 to vector<32x128xf32>
    %23 = arith.mulf %22, %21 : vector<32x128xf32>
    %c0_13 = arith.constant 0 : index
    %c0_14 = arith.constant 0 : index
    %24 = vector.load %arg6[%c0_13, %c0_14] : memref<16x32xbf16, #tpu.memory_space<vmem>>, vector<16x32xbf16>
    %25 = arith.truncf %23 : vector<32x128xf32> to vector<32x128xbf16>
    %cst_15 = arith.constant dense<0.000000e+00> : vector<16x128xf32>
    %26 = tpu.matmul %24, %25, %cst_15 {dimension_numbers = #tpu.dot_dimension_numbers<[1], [0], [0], [1], [0, 0, 1, 1], [], []>} : vector<16x32xbf16>, vector<32x128xbf16>, vector<16x128xf32> -> vector<16x128xf32>
    %c0_16 = arith.constant 0 : index
    %c0_17 = arith.constant 0 : index
    %27 = vector.load %arg7[%c0_16, %c0_17] : memref<16x1xf32, #tpu.memory_space<vmem>>, vector<16x1xf32>
    %28 = vector.broadcast %27 : vector<16x1xf32> to vector<16x128xf32>
    %29 = arith.addf %26, %28 : vector<16x128xf32>
    %cst_18 = arith.constant 5.000000e-01 : f32
    %30 = vector.broadcast %cst_18 : f32 to vector<16x128xf32>
    %31 = arith.mulf %30, %29 : vector<16x128xf32>
    %32 = math.tanh %31 : vector<16x128xf32>
    %cst_19 = arith.constant 1.000000e+00 : f32
    %33 = vector.broadcast %cst_19 : f32 to vector<16x128xf32>
    %34 = arith.addf %32, %33 : vector<16x128xf32>
    %cst_20 = arith.constant 5.000000e-01 : f32
    %35 = vector.broadcast %cst_20 : f32 to vector<16x128xf32>
    %36 = arith.mulf %35, %34 : vector<16x128xf32>
    %c0_21 = arith.constant 0 : index
    %c0_22 = arith.constant 0 : index
    %37 = vector.load %arg8[%c0_21, %c0_22] : memref<16x128xf32, #tpu.memory_space<vmem>>, vector<16x128xf32>
    tpu.vector_store %arg8[%c0_21, %c0_22], %36 {strides = array<i32>} : memref<16x128xf32, #tpu.memory_space<vmem>>, vector<16x128xf32>,
    return
  }
  func.func @transform_0(%arg0: i32) -> (i32, i32) {
    %c0_i32 = arith.constant 0 : i32
    %c0_i32_0 = arith.constant 0 : i32
    return %c0_i32, %arg0 : i32, i32
  }
  func.func @transform_1(%arg0: i32) -> (i32, i32) {
    %c0_i32 = arith.constant 0 : i32
    %c0_i32_0 = arith.constant 0 : i32
    %c0_i32_1 = arith.constant 0 : i32
    return %c0_i32, %c0_i32_0 : i32, i32
  }
  func.func @transform_2(%arg0: i32) -> (i32, i32) {
    %c0_i32 = arith.constant 0 : i32
    %c0_i32_0 = arith.constant 0 : i32
    %c0_i32_1 = arith.constant 0 : i32
    return %c0_i32, %c0_i32_0 : i32, i32
  }
  func.func @transform_3(%arg0: i32) -> (i32, i32) {
    %c0_i32 = arith.constant 0 : i32
    %c0_i32_0 = arith.constant 0 : i32
    %c0_i32_1 = arith.constant 0 : i32
    return %c0_i32, %c0_i32_0 : i32, i32
  }
  func.func @transform_4(%arg0: i32) -> (i32, i32) {
    %c0_i32 = arith.constant 0 : i32
    %c0_i32_0 = arith.constant 0 : i32
    %c0_i32_1 = arith.constant 0 : i32
    return %c0_i32, %c0_i32_0 : i32, i32
  }
  func.func @transform_5(%arg0: i32) -> (i32, i32) {
    %c0_i32 = arith.constant 0 : i32
    %c0_i32_0 = arith.constant 0 : i32
    %c0_i32_1 = arith.constant 0 : i32
    return %c0_i32, %c0_i32_0 : i32, i32
  }
  func.func @transform_6(%arg0: i32) -> (i32, i32) {
    %c0_i32 = arith.constant 0 : i32
    %c0_i32_0 = arith.constant 0 : i32
    %c0_i32_1 = arith.constant 0 : i32
    return %c0_i32, %c0_i32_0 : i32, i32
  }
  func.func @transform_7(%arg0: i32) -> (i32, i32) {
    %c0_i32 = arith.constant 0 : i32
    %c0_i32_0 = arith.constant 0 : i32
    return %c0_i32, %arg0 : i32, i32
  }
}

</mosaic_0001>

<llo_original>
// kernel: tpu_custom_call.1
$region0: #{tpu_custom_call.1}
  #allocation0 [shape = 'u32[]', space=smem, size = 0x4, offset = 0x4, fixed_abs, tag = 'smem constant byte address 0x4 - core index']
  #allocation1 [shape = 'u32[144,128]{1,0:T(1,128)}', space=vmem, size = 0x12000, scoped, tag = 'internal scratch']
  %s0 = inlined_call_operand.vmem [shape: f32[32,512], index: 0, kind: input, shape index: {}]
  %s1 = inlined_call_operand.vmem [shape: bf16[64,32], index: 1, kind: input, shape index: {}]
  %s2 = inlined_call_operand.vmem [shape: f32[64,1], index: 2, kind: input, shape index: {}]
  %s3 = inlined_call_operand.vmem [shape: bf16[32,256], index: 3, kind: input, shape index: {}]
  %s4 = inlined_call_operand.vmem [shape: f32[32,1], index: 4, kind: input, shape index: {}]
  %s5 = inlined_call_operand.vmem [shape: bf16[16,32], index: 5, kind: input, shape index: {}]
  %s6 = inlined_call_operand.vmem [shape: f32[16,1], index: 6, kind: input, shape index: {}]
  %s7 = inlined_call_operand.hbm [shape: f32[16,512], index: 7, kind: output, shape index: {}]
  %s8 = sld [smem:[#allocation0]]
  $region99: #{tpu_custom_call.1} parent=0
    _
  %s10 = ssub.s32 1, %s8
  %s11 = scalar_select 0, %s10, %s8
  $region1: #{tpu_custom_call.1} parent=0
    #allocation2 [shape = 'u8[32768]{0}', space=vmem, size = 0x8000, scoped, tag = 'input window, operand 0']
    #allocation3 [shape = 'u8[16384]{0}', space=vmem, size = 0x4000, scoped, tag = 'output window, operand 0']
    #allocation4 [shape = 's32[2]{0}', space=sflag, size = 0x8, scoped, tag = 'scoped memory for tpu_custom_call.1']
    %12 = vsyncpa [#allocation4], 0
    %s13 = scalar_lea.sflag [#allocation4], 1
    %14 = vsyncpa %s13, 0
    loop: start=0, step=1, limit=6
    $region2: #{tpu_custom_call.1} parent=1 // loop_pre_header
      _
    $region3: #{tpu_custom_call.1} parent=1 // loop_header
      %s16 = sphi 0, %s20
      %p17 = scmp.ge.s32.totalorder %s16, 6
      %s26 = sphi 0, %s28
      %s29 = sphi 0, %s26
      %s30 = sphi 0, %s29
      %s46 = sphi 0, %s30
      %s50 = sphi 0, %s50
      %s52 = sphi 0, %s50
      %s53 = sphi 0, %s52
      %s67 = sphi 0, %s53
      %s71 = sphi 0, %s71
      %s73 = sphi 0, %s71
      %s74 = sphi 0, %s73
      %s88 = sphi 0, %s74
      %s92 = sphi 0, %s92
      %s94 = sphi 0, %s92
      %s95 = sphi 0, %s94
      %s109 = sphi 0, %s95
      %s113 = sphi 0, %s113
      %s115 = sphi 0, %s113
      %s116 = sphi 0, %s115
      %s130 = sphi 0, %s116
      %s134 = sphi 0, %s134
      %s136 = sphi 0, %s134
      %s137 = sphi 0, %s136
      %s151 = sphi 0, %s137
      %s155 = sphi 0, %s155
      %s157 = sphi 0, %s155
      %s158 = sphi 0, %s157
      %s172 = sphi 0, %s158
      %s178 = sphi 0, %s180
      %s181 = sphi 0, %s178
      %s182 = sphi 0, %s181
      %s198 = sphi 0, %s182
    $region4: #{tpu_custom_call.1} parent=1 // loop_header_branch
      %19 = sbr.rel (%p17) target = $region8
    $region5: #{tpu_custom_call.1} parent=1 // loop_body
      %s21 = ssub.s32 %s16, 1
      %s22 = ssub.s32 %s16, 2
      %s23 = sadd.s32 %s16, 1
      %s24 = ssub.s32 %s16, %s23
      %p25 = scmp.eq.s32.totalorder %s24, 0
      %s27 = sadd.s32 %s26, 1
      %s28 = scalar_select %p25, %s26, %s27
      %p31 = pneg %p25
      %p32 = scmp.eq.s32.totalorder %s16, 3
      %p33 = por %p31, %p32
      %p34 = scmp.ne.s32.totalorder %s26, %s29
      %p35 = scmp.eq.s32.totalorder %s16, 0
      %p36 = por %p34, %p35
      %p37 = scmp.ne.s32.totalorder %s26, %s29
      %p38 = scmp.eq.s32.totalorder %s21, 3
      %p39 = por %p37, %p38
      %p40 = scmp.ne.s32.totalorder %s29, %s30
      %p41 = scmp.eq.s32.totalorder %s21, 0
      %p42 = por %p40, %p41
      %p43 = scmp.ne.s32.totalorder %s29, %s30
      %p44 = scmp.eq.s32.totalorder %s22, 3
      %p45 = por %p43, %p44
      %p47 = scmp.ne.s32.totalorder %s30, %s46
      %p48 = scmp.eq.s32.totalorder %s22, 0
      %p49 = por %p47, %p48
      %s51 = sadd.s32 %s50, 1
      %p54 = scmp.eq.s32.totalorder %s16, 3
      %p55 = scmp.ne.s32.totalorder %s50, %s52
      %p56 = scmp.eq.s32.totalorder %s16, 0
      %p57 = por %p55, %p56
      %p58 = scmp.ne.s32.totalorder %s50, %s52
      %p59 = scmp.eq.s32.totalorder %s21, 3
      %p60 = por %p58, %p59
      %p61 = scmp.ne.s32.totalorder %s52, %s53
      %p62 = scmp.eq.s32.totalorder %s21, 0
      %p63 = por %p61, %p62
      %p64 = scmp.ne.s32.totalorder %s52, %s53
      %p65 = scmp.eq.s32.totalorder %s22, 3
      %p66 = por %p64, %p65
      %p68 = scmp.ne.s32.totalorder %s53, %s67
      %p69 = scmp.eq.s32.totalorder %s22, 0
      %p70 = por %p68, %p69
      %s72 = sadd.s32 %s71, 1
      %p75 = scmp.eq.s32.totalorder %s16, 3
      %p76 = scmp.ne.s32.totalorder %s71, %s73
      %p77 = scmp.eq.s32.totalorder %s16, 0
      %p78 = por %p76, %p77
      %p79 = scmp.ne.s32.totalorder %s71, %s73
      %p80 = scmp.eq.s32.totalorder %s21, 3
      %p81 = por %p79, %p80
      %p82 = scmp.ne.s32.totalorder %s73, %s74
      %p83 = scmp.eq.s32.totalorder %s21, 0
      %p84 = por %p82, %p83
      %p85 = scmp.ne.s32.totalorder %s73, %s74
      %p86 = scmp.eq.s32.totalorder %s22, 3
      %p87 = por %p85, %p86
      %p89 = scmp.ne.s32.totalorder %s74, %s88
      %p90 = scmp.eq.s32.totalorder %s22, 0
      %p91 = por %p89, %p90
      %s93 = sadd.s32 %s92, 1
      %p96 = scmp.eq.s32.totalorder %s16, 3
      %p97 = scmp.ne.s32.totalorder %s92, %s94
      %p98 = scmp.eq.s32.totalorder %s16, 0
      %p99 = por %p97, %p98
      %p100 = scmp.ne.s32.totalorder %s92, %s94
      %p101 = scmp.eq.s32.totalorder %s21, 3
      %p102 = por %p100, %p101
      %p103 = scmp.ne.s32.totalorder %s94, %s95
      %p104 = scmp.eq.s32.totalorder %s21, 0
      %p105 = por %p103, %p104
      %p106 = scmp.ne.s32.totalorder %s94, %s95
      %p107 = scmp.eq.s32.totalorder %s22, 3
      %p108 = por %p106, %p107
      %p110 = scmp.ne.s32.totalorder %s95, %s109
      %p111 = scmp.eq.s32.totalorder %s22, 0
      %p112 = por %p110, %p111
      %s114 = sadd.s32 %s113, 1
      %p117 = scmp.eq.s32.totalorder %s16, 3
      %p118 = scmp.ne.s32.totalorder %s113, %s115
      %p119 = scmp.eq.s32.totalorder %s16, 0
      %p120 = por %p118, %p119
      %p121 = scmp.ne.s32.totalorder %s113, %s115
      %p122 = scmp.eq.s32.totalorder %s21, 3
      %p123 = por %p121, %p122
      %p124 = scmp.ne.s32.totalorder %s115, %s116
      %p125 = scmp.eq.s32.totalorder %s21, 0
      %p126 = por %p124, %p125
      %p127 = scmp.ne.s32.totalorder %s115, %s116
      %p128 = scmp.eq.s32.totalorder %s22, 3
      %p129 = por %p127, %p128
      %p131 = scmp.ne.s32.totalorder %s116, %s130
      %p132 = scmp.eq.s32.totalorder %s22, 0
      %p133 = por %p131, %p132
      %s135 = sadd.s32 %s134, 1
      %p138 = scmp.eq.s32.totalorder %s16, 3
      %p139 = scmp.ne.s32.totalorder %s134, %s136
      %p140 = scmp.eq.s32.totalorder %s16, 0
      %p141 = por %p139, %p140
      %p142 = scmp.ne.s32.totalorder %s134, %s136
      %p143 = scmp.eq.s32.totalorder %s21, 3
      %p144 = por %p142, %p143
      %p145 = scmp.ne.s32.totalorder %s136, %s137
      %p146 = scmp.eq.s32.totalorder %s21, 0
      %p147 = por %p145, %p146
      %p148 = scmp.ne.s32.totalorder %s136, %s137
      %p149 = scmp.eq.s32.totalorder %s22, 3
      %p150 = por %p148, %p149
      %p152 = scmp.ne.s32.totalorder %s137, %s151
      %p153 = scmp.eq.s32.totalorder %s22, 0
      %p154 = por %p152, %p153
      %s156 = sadd.s32 %s155, 1
      %p159 = scmp.eq.s32.totalorder %s16, 3
      %p160 = scmp.ne.s32.totalorder %s155, %s157
      %p161 = scmp.eq.s32.totalorder %s16, 0
      %p162 = por %p160, %p161
      %p163 = scmp.ne.s32.totalorder %s155, %s157
      %p164 = scmp.eq.s32.totalorder %s21, 3
      %p165 = por %p163, %p164
      %p166 = scmp.ne.s32.totalorder %s157, %s158
      %p167 = scmp.eq.s32.totalorder %s21, 0
      %p168 = por %p166, %p167
      %p169 = scmp.ne.s32.totalorder %s157, %s158
      %p170 = scmp.eq.s32.totalorder %s22, 3
      %p171 = por %p169, %p170
      %p173 = scmp.ne.s32.totalorder %s158, %s172
      %p174 = scmp.eq.s32.totalorder %s22, 0
      %p175 = por %p173, %p174
      %s176 = ssub.s32 %s16, %s23
      %p177 = scmp.eq.s32.totalorder %s176, 0
      %s179 = sadd.s32 %s178, 1
      %s180 = scalar_select %p177, %s178, %s179
      %p183 = pneg %p177
      %p184 = scmp.eq.s32.totalorder %s16, 3
      %p185 = por %p183, %p184
      %p186 = scmp.ne.s32.totalorder %s178, %s181
      %p187 = scmp.eq.s32.totalorder %s16, 0
      %p188 = por %p186, %p187
      %p189 = scmp.ne.s32.totalorder %s178, %s181
      %p190 = scmp.eq.s32.totalorder %s21, 3
      %p191 = por %p189, %p190
      %p192 = scmp.ne.s32.totalorder %s181, %s182
      %p193 = scmp.eq.s32.totalorder %s21, 0
      %p194 = por %p192, %p193
      %p195 = scmp.ne.s32.totalorder %s181, %s182
      %p196 = scmp.eq.s32.totalorder %s22, 3
      %p197 = por %p195, %p196
      %p199 = scmp.ne.s32.totalorder %s182, %s198
      %p200 = scmp.eq.s32.totalorder %s22, 0
      %p201 = por %p199, %p200
      %p202 = scmp.le.s32.totalorder 1, %s16
      %p203 = scmp.lt.s32.totalorder %s16, 5
      %p204 = pnand %p202, %p203
      %p205 = pneg %p204
      // Predicated region
      $region9: #{tpu_custom_call.1} parent=5 // pred_check
        _
      $region10: #{tpu_custom_call.1} parent=5 // pred_check_branch
        %207 = sbr.rel (%p204) target = $region12
      $region11: #{tpu_custom_call.1} parent=5 // pred_region
        %s208 = ssub.s32 %s16, 1
        // Predicated region
        $region13: #{tpu_custom_call.1} parent=11 // pred_check
          %p209 = pneg %p63
        $region14: #{tpu_custom_call.1} parent=11 // pred_check_branch
          %211 = sbr.rel (%p209) target = $region16
        $region15: #{tpu_custom_call.1} parent=11 // pred_region
          _
        $region16: #{tpu_custom_call.1} parent=11 // pred_fallthru
          _
        // Predicated region
        $region17: #{tpu_custom_call.1} parent=11 // pred_check
          %p212 = pneg %p84
        $region18: #{tpu_custom_call.1} parent=11 // pred_check_branch
          %214 = sbr.rel (%p212) target = $region20
        $region19: #{tpu_custom_call.1} parent=11 // pred_region
          _
        $region20: #{tpu_custom_call.1} parent=11 // pred_fallthru
          _
        // Predicated region
        $region21: #{tpu_custom_call.1} parent=11 // pred_check
          %p215 = pneg %p105
        $region22: #{tpu_custom_call.1} parent=11 // pred_check_branch
          %217 = sbr.rel (%p215) target = $region24
        $region23: #{tpu_custom_call.1} parent=11 // pred_region
          _
        $region24: #{tpu_custom_call.1} parent=11 // pred_fallthru
          _
        // Predicated region
        $region25: #{tpu_custom_call.1} parent=11 // pred_check
          %p218 = pneg %p126
        $region26: #{tpu_custom_call.1} parent=11 // pred_check_branch
          %220 = sbr.rel (%p218) target = $region28
        $region27: #{tpu_custom_call.1} parent=11 // pred_region
          _
        $region28: #{tpu_custom_call.1} parent=11 // pred_fallthru
          _
        // Predicated region
        $region29: #{tpu_custom_call.1} parent=11 // pred_check
          %p221 = pneg %p147
        $region30: #{tpu_custom_call.1} parent=11 // pred_check_branch
          %223 = sbr.rel (%p221) target = $region32
        $region31: #{tpu_custom_call.1} parent=11 // pred_region
          _
        $region32: #{tpu_custom_call.1} parent=11 // pred_fallthru
          _
        // Predicated region
        $region33: #{tpu_custom_call.1} parent=11 // pred_check
          %p224 = pneg %p168
        $region34: #{tpu_custom_call.1} parent=11 // pred_check_branch
          %226 = sbr.rel (%p224) target = $region36
        $region35: #{tpu_custom_call.1} parent=11 // pred_region
          _
        $region36: #{tpu_custom_call.1} parent=11 // pred_fallthru
          _
      $region12: #{tpu_custom_call.1} parent=5 // pred_fallthru
        _
      %p227 = scmp.lt.s32.totalorder %s16, 4
      // Predicated region
      $region37: #{tpu_custom_call.1} parent=5 // pred_check
        %p228 = pneg %p227
      $region38: #{tpu_custom_call.1} parent=5 // pred_check_branch
        %230 = sbr.rel (%p228) target = $region40
      $region39: #{tpu_custom_call.1} parent=5 // pred_region
        // Predicated region
        $region41: #{tpu_custom_call.1} parent=39 // pred_check
          %p231 = pneg %p36
        $region42: #{tpu_custom_call.1} parent=39 // pred_check_branch
          %233 = sbr.rel (%p231) target = $region44
        $region43: #{tpu_custom_call.1} parent=39 // pred_region
          %s234 = sand.u32 %s26, 1
          %s235 = sand.u32 %s26, 1
          %s236 = smul.addr %s235, 32
          %s237 = scalar_lea.vmem [#allocation2], %s236
          %s238 = smul.addr %s16, 8
          %s239 = scalar_lea.vmem %s0, %s238
          // Predicated region
          $region45: #{tpu_custom_call.1} parent=43 // pred_check
            _
          $region46: #{tpu_custom_call.1} parent=43 // pred_check_branch
            %241 = sbr.rel (0) target = $region48
          $region47: #{tpu_custom_call.1} parent=43 // pred_region
            // Predicated region
            $region49: #{tpu_custom_call.1} parent=47 // pred_check
              _
            $region50: #{tpu_custom_call.1} parent=47 // pred_check_branch
              %243 = sbr.rel (0) target = $region52
            $region51: #{tpu_custom_call.1} parent=47 // pred_region
              // Predicated region
              $region64: #{tpu_custom_call.1} parent=51 // pred_check
                _
              $region65: #{tpu_custom_call.1} parent=51 // pred_check_branch
                %264 = sbr.rel (0) target = $region67
              $region66: #{tpu_custom_call.1} parent=51 // pred_region
                loop: start=0, step=1, limit=1
                $region68: #{tpu_custom_call.1} parent=66 // loop_pre_header
                  _
                $region69: #{tpu_custom_call.1} parent=66 // loop_header
                  %s266 = sphi 0, %s270
                  %p267 = scmp.ge.s32.totalorder %s266, 1
                  %s271 = sphi %s239, %s239
                  %s272 = sphi %s237, %s237
                $region70: #{tpu_custom_call.1} parent=66 // loop_header_branch
                  %269 = sbr.rel (%p267) target = $region74
                $region71: #{tpu_custom_call.1} parent=66 // loop_body
                  %v273 = vld [vmem:[%s271] sm:$0xff]
                  %274 = vst [vmem:[%s272] sm:$0xff] %v273
                  %v275 = vld [vmem:[%s271 + $0x20] sm:$0xff]
                  %276 = vst [vmem:[%s272 + $0x8] sm:$0xff] %v275
                  %v277 = vld [vmem:[%s271 + $0x40] sm:$0xff]
                  %278 = vst [vmem:[%s272 + $0x10] sm:$0xff] %v277
                  %v279 = vld [vmem:[%s271 + $0x60] sm:$0xff]
                  %280 = vst [vmem:[%s272 + $0x18] sm:$0xff] %v279
                $region72: #{tpu_custom_call.1} parent=66 // loop_footer
                  %s270 = sadd.s32 1, %s266
                $region73: #{tpu_custom_call.1} parent=66 // loop_footer_branch
                  %265 = sbr.rel target = $region69
                $region74: #{tpu_custom_call.1} parent=66 // loop_exit
                  _
              $region67: #{tpu_custom_call.1} parent=51 // pred_fallthru
                _
              // Predicated region
              $region75: #{tpu_custom_call.1} parent=51 // pred_check
                _
              $region76: #{tpu_custom_call.1} parent=51 // pred_check_branch
                %282 = sbr.rel target = $region78
              $region77: #{tpu_custom_call.1} parent=51 // pred_region
                _
              $region78: #{tpu_custom_call.1} parent=51 // pred_fallthru
                _
            $region52: #{tpu_custom_call.1} parent=47 // pred_fallthru
              _
            // Predicated region
            $region53: #{tpu_custom_call.1} parent=47 // pred_check
              _
            $region54: #{tpu_custom_call.1} parent=47 // pred_check_branch
              %245 = sbr.rel target = $region56
            $region55: #{tpu_custom_call.1} parent=47 // pred_region
              loop: start=0, step=1, limit=1
              $region57: #{tpu_custom_call.1} parent=55 // loop_pre_header
                _
              $region58: #{tpu_custom_call.1} parent=55 // loop_header
                %s248 = sphi 0, %s252
                %p249 = scmp.ge.s32.totalorder %s248, 1
                %s253 = sphi %s239, %s239
                %s254 = sphi %s237, %s237
              $region59: #{tpu_custom_call.1} parent=55 // loop_header_branch
                %251 = sbr.rel (%p249) target = $region63
              $region60: #{tpu_custom_call.1} parent=55 // loop_body
                %v255 = vld [vmem:[%s253] sm:$0xff]
                %256 = vst [vmem:[%s254] sm:$0xff] %v255
                %v257 = vld [vmem:[%s253 + $0x20] sm:$0xff]
                %258 = vst [vmem:[%s254 + $0x8] sm:$0xff] %v257
                %v259 = vld [vmem:[%s253 + $0x40] sm:$0xff]
                %260 = vst [vmem:[%s254 + $0x10] sm:$0xff] %v259
                %v261 = vld [vmem:[%s253 + $0x60] sm:$0xff]
                %262 = vst [vmem:[%s254 + $0x18] sm:$0xff] %v261
              $region61: #{tpu_custom_call.1} parent=55 // loop_footer
                %s252 = sadd.s32 1, %s248
              $region62: #{tpu_custom_call.1} parent=55 // loop_footer_branch
                %247 = sbr.rel target = $region58
              $region63: #{tpu_custom_call.1} parent=55 // loop_exit
                _
            $region56: #{tpu_custom_call.1} parent=47 // pred_fallthru
              _
          $region48: #{tpu_custom_call.1} parent=43 // pred_fallthru
            _
          %283 = vnop
        $region44: #{tpu_custom_call.1} parent=39 // pred_fallthru
          _
      $region40: #{tpu_custom_call.1} parent=5 // pred_fallthru
        _
      %p284 = scmp.le.s32.totalorder 1, %s16
      %p285 = scmp.lt.s32.totalorder %s16, 5
      %p286 = pnand %p284, %p285
      %p287 = pneg %p286
      // Predicated region
      $region79: #{tpu_custom_call.1} parent=5 // pred_check
        _
      $region80: #{tpu_custom_call.1} parent=5 // pred_check_branch
        %289 = sbr.rel (%p286) target = $region82
      $region81: #{tpu_custom_call.1} parent=5 // pred_region
        %s290 = ssub.s32 %s16, 1
        %s291 = sand.u32 %s29, 1
        %s292 = sand.u32 %s29, 1
        %s293 = smul.addr %s292, 32
        %s294 = scalar_lea.vmem [#allocation2], %s293
        // Predicated region
        $region83: #{tpu_custom_call.1} parent=81 // pred_check
          %p295 = pneg %p42
        $region84: #{tpu_custom_call.1} parent=81 // pred_check_branch
          %297 = sbr.rel (%p295) target = $region86
        $region85: #{tpu_custom_call.1} parent=81 // pred_region
          _
        $region86: #{tpu_custom_call.1} parent=81 // pred_fallthru
          _
        %s298 = sand.u32 %s29, 1
        %s299 = sand.u32 %s29, 1
        %s300 = smul.addr %s299, 32
        %s301 = scalar_lea.vmem [#allocation2], %s300
        %p302 = pneg %p42
        %p303 = pneg %p39
        %p304 = pneg %p63
        %p305 = pneg %p60
        %p306 = pneg %p84
        %p307 = pneg %p81
        %p308 = pneg %p105
        %p309 = pneg %p102
        %p310 = pneg %p126
        %p311 = pneg %p123
        %p312 = pneg %p147
        %p313 = pneg %p144
        %p314 = pneg %p168
        %p315 = pneg %p165
        %p316 = pneg %p194
        %p317 = pneg %p191
        %s318 = sand.u32 %s181, 1
        %s319 = scalar_lea.sflag [#allocation4], %s318
        %s320 = sand.u32 %s181, 1
        %s321 = smul.addr %s320, 16
        %s322 = scalar_lea.vmem [#allocation3], %s321
        %v324 = vld [vmem:[%s294] sm:$0xff]
        %v325 = vld [vmem:[%s294 + $0x8] sm:$0xff]
        %v326 = vld [vmem:[%s294 + $0x10] sm:$0xff]
        %v327 = vld [vmem:[%s294 + $0x18] sm:$0xff]
        %v328 = vpack.c.bf16 %v325, %v324
        %v329 = vpack.c.bf16 %v327, %v326
        %v330 = vld [vmem:[%s1] sm:$0xf]
        %v331 = vld [vmem:[%s1 + $0x4] sm:$0xf]
        %v332 = vld [vmem:[%s1 + $0x8] sm:$0xf]
        %v333 = vld [vmem:[%s1 + $0xc] sm:$0xf]
        %v334 = vld [vmem:[%s1 + $0x10] sm:$0xf]
        %v335 = vld [vmem:[%s1 + $0x14] sm:$0xf]
        %v336 = vld [vmem:[%s1 + $0x18] sm:$0xf]
        %v337 = vld [vmem:[%s1 + $0x1c] sm:$0xf]
        %v338 = vld [vmem:[%s2] sm:$0xff]
        %v339 = vld [vmem:[%s2 + $0x8] sm:$0xff]
        %v340 = vld [vmem:[%s2 + $0x10] sm:$0xff]
        %v341 = vld [vmem:[%s2 + $0x18] sm:$0xff]
        %v342 = vld [vmem:[%s2 + $0x20] sm:$0xff]
        %v343 = vld [vmem:[%s2 + $0x28] sm:$0xff]
        %v344 = vld [vmem:[%s2 + $0x30] sm:$0xff]
        %v345 = vld [vmem:[%s2 + $0x38] sm:$0xff]
        %347 = vset.pattern.permute.xlu0 0
        %348 = vperm.xlu0 %347, %v338
        %v349 = vpop.permute.xlu0 %348
        %352 = vset.pattern.permute.xlu0 0
        %353 = vperm.xlu0 %352, %v339
        %v354 = vpop.permute.xlu0 %353
        %357 = vset.pattern.permute.xlu0 0
        %358 = vperm.xlu0 %357, %v340
        %v359 = vpop.permute.xlu0 %358
        %362 = vset.pattern.permute.xlu0 0
        %363 = vperm.xlu0 %362, %v341
        %v364 = vpop.permute.xlu0 %363
        %367 = vset.pattern.permute.xlu0 0
        %368 = vperm.xlu0 %367, %v342
        %v369 = vpop.permute.xlu0 %368
        %372 = vset.pattern.permute.xlu0 0
        %373 = vperm.xlu0 %372, %v343
        %v374 = vpop.permute.xlu0 %373
        %377 = vset.pattern.permute.xlu0 0
        %378 = vperm.xlu0 %377, %v344
        %v379 = vpop.permute.xlu0 %378
        %382 = vset.pattern.permute.xlu0 0
        %383 = vperm.xlu0 %382, %v345
        %v384 = vpop.permute.xlu0 %383
        %v394 = vunpack.c.l.b16 %v330
        %v395 = vunpack.c.l.b16 %v331
        %v396 = vunpack.c.l.b16 %v332
        %v397 = vunpack.c.l.b16 %v333
        %v398 = vunpack.c.l.b16 %v334
        %v399 = vunpack.c.l.b16 %v335
        %v400 = vunpack.c.l.b16 %v336
        %v401 = vunpack.c.l.b16 %v337
        %v402 = vpack.c.b16 %v395, %v394
        %v403 = vpack.c.b16 %v397, %v396
        %v404 = vpack.c.b16 %v399, %v398
        %v405 = vpack.c.b16 %v401, %v400
        %vm406 = vcmask 261120
        %v408 = vsel %vm406, %v402, 0
        %v411 = vsel %vm406, %v403, 0
        %v414 = vsel %vm406, %v404, 0
        %v417 = vsel %vm406, %v405, 0
        %419 = vmatprep.subr.bf16.mxu0 0
        %420 = vmatpush1.bf16.msra.mxu0 %v328
        %421 = vmatprep.subr.bf16.mxu0 0
        %422 = vmatpush1.bf16.msra.mxu0 %v329
        %423 = vmatprep.subr.bf16.mxu0 0
        %424 = vmatpush1.bf16.msra.mxu0 0
        %425 = vmatprep.subr.bf16.mxu0 0
        %426 = vmatpush1.bf16.msra.mxu0 0
        %427 = vmatprep.subr.bf16.mxu0 0
        %428 = vmatpush1.bf16.msra.mxu0 0
        %429 = vmatprep.subr.bf16.mxu0 0
        %430 = vmatpush1.bf16.msra.mxu0 0
        %431 = vmatprep.subr.bf16.mxu0 0
        %432 = vmatpush1.bf16.msra.mxu0 0
        %433 = vmatprep.subr.bf16.mxu0 0
        %434 = vmatpush1.bf16.msra.mxu0 0
        %435 = vmatprep.subr.bf16.mxu0 0
        %436 = vmatpush1.bf16.msra.mxu0 0
        %437 = vmatprep.subr.bf16.mxu0 0
        %438 = vmatpush1.bf16.msra.mxu0 0
        %439 = vmatprep.subr.bf16.mxu0 0
        %440 = vmatpush1.bf16.msra.mxu0 0
        %441 = vmatprep.subr.bf16.mxu0 0
        %442 = vmatpush1.bf16.msra.mxu0 0
        %443 = vmatprep.subr.bf16.mxu0 0
        %444 = vmatpush1.bf16.msra.mxu0 0
        %445 = vmatprep.subr.bf16.mxu0 0
        %446 = vmatpush1.bf16.msra.mxu0 0
        %447 = vmatprep.subr.bf16.mxu0 0
        %448 = vmatpush1.bf16.msra.mxu0 0
        %449 = vmatprep.subr.bf16.mxu0 0
        %450 = vmatpush1.bf16.msra.mxu0 0
        %451 = vmatprep.mubr.bf16.mxu0 0
        %452 = vmatmul.mubr.bf16.gmra.mrb[0].mxu0 %v408
        %v453 = vpop.f32.mrb[0].mxu0
        %v454 = vadd.f32 %v349, %v453
        %v455 = vpop.f32.mrb[0].mxu0
        %v456 = vpop.f32.mrb[0].mxu0
        %v457 = vadd.f32 %v354, %v456
        %v458 = vpop.f32.mrb[0].mxu0
        %459 = vmatprep.mubr.bf16.mxu0 0
        %460 = vmatmul.mubr.bf16.gmra.mrb[0].mxu0 %v411
        %v461 = vpop.f32.mrb[0].mxu0
        %v462 = vadd.f32 %v359, %v461
        %v463 = vpop.f32.mrb[0].mxu0
        %v464 = vpop.f32.mrb[0].mxu0
        %v465 = vadd.f32 %v364, %v464
        %v466 = vpop.f32.mrb[0].mxu0
        %467 = vmatprep.mubr.bf16.mxu0 0
        %468 = vmatmul.mubr.bf16.gmra.mrb[0].mxu0 %v414
        %v469 = vpop.f32.mrb[0].mxu0
        %v470 = vadd.f32 %v369, %v469
        %v471 = vpop.f32.mrb[0].mxu0
        %v472 = vpop.f32.mrb[0].mxu0
        %v473 = vadd.f32 %v374, %v472
        %v474 = vpop.f32.mrb[0].mxu0
        %475 = vmatprep.mubr.bf16.mxu0 0
        %476 = vmatmul.mubr.bf16.gmra.mrb[0].mxu0 %v417
        %v477 = vpop.f32.mrb[0].mxu0
        %v478 = vadd.f32 %v379, %v477
        %v479 = vpop.f32.mrb[0].mxu0
        %v480 = vpop.f32.mrb[0].mxu0
        %v481 = vadd.f32 %v384, %v480
        %v482 = vpop.f32.mrb[0].mxu0
        %483 = vdwg.mxu0
        %v484 = vmul.f32 %v454, %v454
        %v485 = vmul.f32 %v457, %v457
        %v486 = vmul.f32 %v462, %v462
        %v487 = vmul.f32 %v465, %v465
        %v488 = vmul.f32 %v470, %v470
        %v489 = vmul.f32 %v473, %v473
        %v490 = vmul.f32 %v478, %v478
        %v491 = vmul.f32 %v481, %v481
        %v492 = vand.u32 2147483647, %v454
        %vm493 = vcmp.le.f32.partialorder %v492, 0.7853982
        %vm494 = vcmp.lt.s32.totalorder %v454, 0
        %v495 = vand.u32 %v454, 2139095040
        %v496 = vshrl.u32 %v495, 23
        %v497 = vsub.s32 %v496, 127
        %v498 = vand.u32 2147483647, %v454
        %v499 = vand.u32 %v498, 8388607
        %v500 = vor.u32 %v499, 8388608
        %v501 = vsub.s32 0, %v500
        %v502 = vadd.s32 %v497, 1
        %vm503 = vcmp.gt.s32.totalorder %v502, 0
        %v504 = vsel %vm503, %v502, 0
        %v505 = vshrl.u32 %v504, 5
        %v506 = vand.u32 %v504, 31
        %v507 = vsub.s32 32, %v506
        %v508 = vshrl.u32 683565275, %v507
        %v509 = vshll.u32 683565275, %v506
        %v510 = vshrl.u32 2475754826, %v507
        %v511 = vor.u32 %v509, %v510
        %v512 = vshll.u32 2475754826, %v506
        %v513 = vshrl.u32 2131351028, %v507
        %v514 = vor.u32 %v512, %v513
        %v515 = vshll.u32 2131351028, %v506
        %v516 = vshrl.u32 2102212464, %v507
        %v517 = vor.u32 %v515, %v516
        %v518 = vshll.u32 2102212464, %v506
        %v519 = vshrl.u32 920167782, %v507
        %v520 = vor.u32 %v518, %v519
        %v521 = vshll.u32 920167782, %v506
        %v522 = vshrl.u32 1326507024, %v507
        %v523 = vor.u32 %v521, %v522
        %vm524 = vcmp.lt.s32.totalorder %v505, 1
        %vm525 = vcmp.lt.s32.totalorder %v505, 2
        %vm526 = vcmp.lt.s32.totalorder %v505, 3
        %vm527 = vcmp.lt.s32.totalorder %v505, 4
        %v528 = vsel %vm524, %v508, %v511
        %v529 = vsel %vm527, %v517, 2102212464
        %v530 = vsel %vm526, %v514, %v529
        %v531 = vsel %vm525, %v528, %v530
        %v532 = vsel %vm524, %v511, %v514
        %v533 = vsel %vm527, %v520, 920167782
        %v534 = vsel %vm526, %v517, %v533
        %v535 = vsel %vm525, %v532, %v534
        %v536 = vsel %vm524, %v514, %v517
        %v537 = vsel %vm527, %v523, 1326507024
        %v538 = vsel %vm526, %v520, %v537
        %v539 = vsel %vm525, %v536, %v538
        %v540 = vshll.u32 %v500, 8
        %v541 = vmul.u32.u64.compose %v540, %v539
        %v542 = vextract.low.u32 %v541
        %v543 = vextract.high.u32 %v541
        %v544 = vmul.u32.u64.compose %v540, %v535
        %v545 = vextract.low.u32 %v544
        %v546 = vextract.high.u32 %v544
        %v547 = vmul.u32 %v540, %v531
        %v548 = vadd.s32 %v543, %v545
        %vm549 = vc.u32 %v543, %v545
        %v550 = vadd.s32 %v546, 1
        %v551 = vsel %vm549, %v550, %v546
        %v552 = vadd.s32 %v547, %v551
        %v553 = vadd.s32 %v552, 536870912
        %v554 = vshrl.u32 %v553, 30
        %v555 = vshll.u32 %v554, 30
        %v556 = vsub.s32 %v552, %v555
        %vm557 = vcmp.lt.s32.totalorder %v556, 0
        %v558 = vsub.s32 0, %v556
        %v559 = vsel %vm557, %v558, %v556
        %v560 = vclz %v559
        %v561 = vsub.s32 %v560, 2
        %vm562 = vcmp.gt.s32.totalorder 0, %v561
        %v563 = vsel %vm562, 0, %v561
        %v564 = vsub.s32 32, %v563
        %v565 = vshll.u32 %v556, %v563
        %v566 = vshrl.u32 %v548, %v564
        %v567 = vor.u32 %v565, %v566
        %v568 = vsub.s32 4294967266, %v563
        %v569 = vadd.s32 %v568, 127
        %v570 = vshll.u32 %v569, 23
        %v571 = vor.u32 4788187, %v570
        %v572 = vand.u32 2147483647, %v571
        %v574 = vcvt.s32.f32 %v567
        %v575 = vmul.f32 %v574, %v572
        %v576 = vxor.u32 %v575, 2147483648
        %v577 = vsel %vm494, %v576, %v575
        %v578 = vsub.s32 4, %v554
        %v579 = vsel %vm494, %v578, %v554
        %v580 = vsel %vm493, %v454, %v577
        %v581 = vsel %vm493, 0, %v579
        %v582 = vcosq.f32.pop %v580
        %v583 = vsinq.f32.pop %v580
        %vm584 = vweird.f32 %v454
        %v585 = vadd.s32 %v581, 3
        %v586 = vand.u32 %v585, 3
        %vm587 = vcmp.lt.s32.totalorder %v586, 2
        %vm588 = vcmp.eq.s32.totalorder %v586, 0
        %v589 = vxor.u32 %v583, 2147483648
        %v590 = vsel %vm588, %v582, %v589
        %vm591 = vcmp.eq.s32.totalorder %v586, 2
        %v592 = vxor.u32 %v582, 2147483648
        %v593 = vsel %vm591, %v592, %v583
        %v594 = vsel %vm587, %v590, %v593
        %v595 = vsel %vm584, nan, %v594
        %v596 = vand.u32 2147483647, %v457
        %vm597 = vcmp.le.f32.partialorder %v596, 0.7853982
        %vm598 = vcmp.lt.s32.totalorder %v457, 0
        %v599 = vand.u32 %v457, 2139095040
        %v600 = vshrl.u32 %v599, 23
        %v601 = vsub.s32 %v600, 127
        %v602 = vand.u32 2147483647, %v457
        %v603 = vand.u32 %v602, 8388607
        %v604 = vor.u32 %v603, 8388608
        %v605 = vsub.s32 0, %v604
        %v606 = vadd.s32 %v601, 1
        %vm607 = vcmp.gt.s32.totalorder %v606, 0
        %v608 = vsel %vm607, %v606, 0
        %v609 = vshrl.u32 %v608, 5
        %v610 = vand.u32 %v608, 31
        %v611 = vsub.s32 32, %v610
        %v612 = vshrl.u32 683565275, %v611
        %v613 = vshll.u32 683565275, %v610
        %v614 = vshrl.u32 2475754826, %v611
        %v615 = vor.u32 %v613, %v614
        %v616 = vshll.u32 2475754826, %v610
        %v617 = vshrl.u32 2131351028, %v611
        %v618 = vor.u32 %v616, %v617
        %v619 = vshll.u32 2131351028, %v610
        %v620 = vshrl.u32 2102212464, %v611
        %v621 = vor.u32 %v619, %v620
        %v622 = vshll.u32 2102212464, %v610
        %v623 = vshrl.u32 920167782, %v611
        %v624 = vor.u32 %v622, %v623
        %v625 = vshll.u32 920167782, %v610
        %v626 = vshrl.u32 1326507024, %v611
        %v627 = vor.u32 %v625, %v626
        %vm628 = vcmp.lt.s32.totalorder %v609, 1
        %vm629 = vcmp.lt.s32.totalorder %v609, 2
        %vm630 = vcmp.lt.s32.totalorder %v609, 3
        %vm631 = vcmp.lt.s32.totalorder %v609, 4
        %v632 = vsel %vm628, %v612, %v615
        %v633 = vsel %vm631, %v621, 2102212464
        %v634 = vsel %vm630, %v618, %v633
        %v635 = vsel %vm629, %v632, %v634
        %v636 = vsel %vm628, %v615, %v618
        %v637 = vsel %vm631, %v624, 920167782
        %v638 = vsel %vm630, %v621, %v637
        %v639 = vsel %vm629, %v636, %v638
        %v640 = vsel %vm628, %v618, %v621
        %v641 = vsel %vm631, %v627, 1326507024
        %v642 = vsel %vm630, %v624, %v641
        %v643 = vsel %vm629, %v640, %v642
        %v644 = vshll.u32 %v604, 8
        %v645 = vmul.u32.u64.compose %v644, %v643
        %v646 = vextract.low.u32 %v645
        %v647 = vextract.high.u32 %v645
        %v648 = vmul.u32.u64.compose %v644, %v639
        %v649 = vextract.low.u32 %v648
        %v650 = vextract.high.u32 %v648
        %v651 = vmul.u32 %v644, %v635
        %v652 = vadd.s32 %v647, %v649
        %vm653 = vc.u32 %v647, %v649
        %v654 = vadd.s32 %v650, 1
        %v655 = vsel %vm653, %v654, %v650
        %v656 = vadd.s32 %v651, %v655
        %v657 = vadd.s32 %v656, 536870912
        %v658 = vshrl.u32 %v657, 30
        %v659 = vshll.u32 %v658, 30
        %v660 = vsub.s32 %v656, %v659
        %vm661 = vcmp.lt.s32.totalorder %v660, 0
        %v662 = vsub.s32 0, %v660
        %v663 = vsel %vm661, %v662, %v660
        %v664 = vclz %v663
        %v665 = vsub.s32 %v664, 2
        %vm666 = vcmp.gt.s32.totalorder 0, %v665
        %v667 = vsel %vm666, 0, %v665
        %v668 = vsub.s32 32, %v667
        %v669 = vshll.u32 %v660, %v667
        %v670 = vshrl.u32 %v652, %v668
        %v671 = vor.u32 %v669, %v670
        %v672 = vsub.s32 4294967266, %v667
        %v673 = vadd.s32 %v672, 127
        %v674 = vshll.u32 %v673, 23
        %v675 = vor.u32 4788187, %v674
        %v676 = vand.u32 2147483647, %v675
        %v678 = vcvt.s32.f32 %v671
        %v679 = vmul.f32 %v678, %v676
        %v680 = vxor.u32 %v679, 2147483648
        %v681 = vsel %vm598, %v680, %v679
        %v682 = vsub.s32 4, %v658
        %v683 = vsel %vm598, %v682, %v658
        %v684 = vsel %vm597, %v457, %v681
        %v685 = vsel %vm597, 0, %v683
        %v686 = vcosq.f32.pop %v684
        %v687 = vsinq.f32.pop %v684
        %vm688 = vweird.f32 %v457
        %v689 = vadd.s32 %v685, 3
        %v690 = vand.u32 %v689, 3
        %vm691 = vcmp.lt.s32.totalorder %v690, 2
        %vm692 = vcmp.eq.s32.totalorder %v690, 0
        %v693 = vxor.u32 %v687, 2147483648
        %v694 = vsel %vm692, %v686, %v693
        %vm695 = vcmp.eq.s32.totalorder %v690, 2
        %v696 = vxor.u32 %v686, 2147483648
        %v697 = vsel %vm695, %v696, %v687
        %v698 = vsel %vm691, %v694, %v697
        %v699 = vsel %vm688, nan, %v698
        %v700 = vand.u32 2147483647, %v462
        %vm701 = vcmp.le.f32.partialorder %v700, 0.7853982
        %vm702 = vcmp.lt.s32.totalorder %v462, 0
        %v703 = vand.u32 %v462, 2139095040
        %v704 = vshrl.u32 %v703, 23
        %v705 = vsub.s32 %v704, 127
        %v706 = vand.u32 2147483647, %v462
        %v707 = vand.u32 %v706, 8388607
        %v708 = vor.u32 %v707, 8388608
        %v709 = vsub.s32 0, %v708
        %v710 = vadd.s32 %v705, 1
        %vm711 = vcmp.gt.s32.totalorder %v710, 0
        %v712 = vsel %vm711, %v710, 0
        %v713 = vshrl.u32 %v712, 5
        %v714 = vand.u32 %v712, 31
        %v715 = vsub.s32 32, %v714
        %v716 = vshrl.u32 683565275, %v715
        %v717 = vshll.u32 683565275, %v714
        %v718 = vshrl.u32 2475754826, %v715
        %v719 = vor.u32 %v717, %v718
        %v720 = vshll.u32 2475754826, %v714
        %v721 = vshrl.u32 2131351028, %v715
        %v722 = vor.u32 %v720, %v721
        %v723 = vshll.u32 2131351028, %v714
        %v724 = vshrl.u32 2102212464, %v715
        %v725 = vor.u32 %v723, %v724
        %v726 = vshll.u32 2102212464, %v714
        %v727 = vshrl.u32 920167782, %v715
        %v728 = vor.u32 %v726, %v727
        %v729 = vshll.u32 920167782, %v714
        %v730 = vshrl.u32 1326507024, %v715
        %v731 = vor.u32 %v729, %v730
        %vm732 = vcmp.lt.s32.totalorder %v713, 1
        %vm733 = vcmp.lt.s32.totalorder %v713, 2
        %vm734 = vcmp.lt.s32.totalorder %v713, 3
        %vm735 = vcmp.lt.s32.totalorder %v713, 4
        %v736 = vsel %vm732, %v716, %v719
        %v737 = vsel %vm735, %v725, 2102212464
        %v738 = vsel %vm734, %v722, %v737
        %v739 = vsel %vm733, %v736, %v738
        %v740 = vsel %vm732, %v719, %v722
        %v741 = vsel %vm735, %v728, 920167782
        %v742 = vsel %vm734, %v725, %v741
        %v743 = vsel %vm733, %v740, %v742
        %v744 = vsel %vm732, %v722, %v725
        %v745 = vsel %vm735, %v731, 1326507024
        %v746 = vsel %vm734, %v728, %v745
        %v747 = vsel %vm733, %v744, %v746
        %v748 = vshll.u32 %v708, 8
        %v749 = vmul.u32.u64.compose %v748, %v747
        %v750 = vextract.low.u32 %v749
        %v751 = vextract.high.u32 %v749
        %v752 = vmul.u32.u64.compose %v748, %v743
        %v753 = vextract.low.u32 %v752
        %v754 = vextract.high.u32 %v752
        %v755 = vmul.u32 %v748, %v739
        %v756 = vadd.s32 %v751, %v753
        %vm757 = vc.u32 %v751, %v753
        %v758 = vadd.s32 %v754, 1
        %v759 = vsel %vm757, %v758, %v754
        %v760 = vadd.s32 %v755, %v759
        %v761 = vadd.s32 %v760, 536870912
        %v762 = vshrl.u32 %v761, 30
        %v763 = vshll.u32 %v762, 30
        %v764 = vsub.s32 %v760, %v763
        %vm765 = vcmp.lt.s32.totalorder %v764, 0
        %v766 = vsub.s32 0, %v764
        %v767 = vsel %vm765, %v766, %v764
        %v768 = vclz %v767
        %v769 = vsub.s32 %v768, 2
        %vm770 = vcmp.gt.s32.totalorder 0, %v769
        %v771 = vsel %vm770, 0, %v769
        %v772 = vsub.s32 32, %v771
        %v773 = vshll.u32 %v764, %v771
        %v774 = vshrl.u32 %v756, %v772
        %v775 = vor.u32 %v773, %v774
        %v776 = vsub.s32 4294967266, %v771
        %v777 = vadd.s32 %v776, 127
        %v778 = vshll.u32 %v777, 23
        %v779 = vor.u32 4788187, %v778
        %v780 = vand.u32 2147483647, %v779
        %v782 = vcvt.s32.f32 %v775
        %v783 = vmul.f32 %v782, %v780
        %v784 = vxor.u32 %v783, 2147483648
        %v785 = vsel %vm702, %v784, %v783
        %v786 = vsub.s32 4, %v762
        %v787 = vsel %vm702, %v786, %v762
        %v788 = vsel %vm701, %v462, %v785
        %v789 = vsel %vm701, 0, %v787
        %v790 = vcosq.f32.pop %v788
        %v791 = vsinq.f32.pop %v788
        %vm792 = vweird.f32 %v462
        %v793 = vadd.s32 %v789, 3
        %v794 = vand.u32 %v793, 3
        %vm795 = vcmp.lt.s32.totalorder %v794, 2
        %vm796 = vcmp.eq.s32.totalorder %v794, 0
        %v797 = vxor.u32 %v791, 2147483648
        %v798 = vsel %vm796, %v790, %v797
        %vm799 = vcmp.eq.s32.totalorder %v794, 2
        %v800 = vxor.u32 %v790, 2147483648
        %v801 = vsel %vm799, %v800, %v791
        %v802 = vsel %vm795, %v798, %v801
        %v803 = vsel %vm792, nan, %v802
        %v804 = vand.u32 2147483647, %v465
        %vm805 = vcmp.le.f32.partialorder %v804, 0.7853982
        %vm806 = vcmp.lt.s32.totalorder %v465, 0
        %v807 = vand.u32 %v465, 2139095040
        %v808 = vshrl.u32 %v807, 23
        %v809 = vsub.s32 %v808, 127
        %v810 = vand.u32 2147483647, %v465
        %v811 = vand.u32 %v810, 8388607
        %v812 = vor.u32 %v811, 8388608
        %v813 = vsub.s32 0, %v812
        %v814 = vadd.s32 %v809, 1
        %vm815 = vcmp.gt.s32.totalorder %v814, 0
        %v816 = vsel %vm815, %v814, 0
        %v817 = vshrl.u32 %v816, 5
        %v818 = vand.u32 %v816, 31
        %v819 = vsub.s32 32, %v818
        %v820 = vshrl.u32 683565275, %v819
        %v821 = vshll.u32 683565275, %v818
        %v822 = vshrl.u32 2475754826, %v819
        %v823 = vor.u32 %v821, %v822
        %v824 = vshll.u32 2475754826, %v818
        %v825 = vshrl.u32 2131351028, %v819
        %v826 = vor.u32 %v824, %v825
        %v827 = vshll.u32 2131351028, %v818
        %v828 = vshrl.u32 2102212464, %v819
        %v829 = vor.u32 %v827, %v828
        %v830 = vshll.u32 2102212464, %v818
        %v831 = vshrl.u32 920167782, %v819
        %v832 = vor.u32 %v830, %v831
        %v833 = vshll.u32 920167782, %v818
        %v834 = vshrl.u32 1326507024, %v819
        %v835 = vor.u32 %v833, %v834
        %vm836 = vcmp.lt.s32.totalorder %v817, 1
        %vm837 = vcmp.lt.s32.totalorder %v817, 2
        %vm838 = vcmp.lt.s32.totalorder %v817, 3
        %vm839 = vcmp.lt.s32.totalorder %v817, 4
        %v840 = vsel %vm836, %v820, %v823
        %v841 = vsel %vm839, %v829, 2102212464
        %v842 = vsel %vm838, %v826, %v841
        %v843 = vsel %vm837, %v840, %v842
        %v844 = vsel %vm836, %v823, %v826
        %v845 = vsel %vm839, %v832, 920167782
        %v846 = vsel %vm838, %v829, %v845
        %v847 = vsel %vm837, %v844, %v846
        %v848 = vsel %vm836, %v826, %v829
        %v849 = vsel %vm839, %v835, 1326507024
        %v850 = vsel %vm838, %v832, %v849
        %v851 = vsel %vm837, %v848, %v850
        %v852 = vshll.u32 %v812, 8
        %v853 = vmul.u32.u64.compose %v852, %v851
        %v854 = vextract.low.u32 %v853
        %v855 = vextract.high.u32 %v853
        %v856 = vmul.u32.u64.compose %v852, %v847
        %v857 = vextract.low.u32 %v856
        %v858 = vextract.high.u32 %v856
        %v859 = vmul.u32 %v852, %v843
        %v860 = vadd.s32 %v855, %v857
        %vm861 = vc.u32 %v855, %v857
        %v862 = vadd.s32 %v858, 1
        %v863 = vsel %vm861, %v862, %v858
        %v864 = vadd.s32 %v859, %v863
        %v865 = vadd.s32 %v864, 536870912
        %v866 = vshrl.u32 %v865, 30
        %v867 = vshll.u32 %v866, 30
        %v868 = vsub.s32 %v864, %v867
        %vm869 = vcmp.lt.s32.totalorder %v868, 0
        %v870 = vsub.s32 0, %v868
        %v871 = vsel %vm869, %v870, %v868
        %v872 = vclz %v871
        %v873 = vsub.s32 %v872, 2
        %vm874 = vcmp.gt.s32.totalorder 0, %v873
        %v875 = vsel %vm874, 0, %v873
        %v876 = vsub.s32 32, %v875
        %v877 = vshll.u32 %v868, %v875
        %v878 = vshrl.u32 %v860, %v876
        %v879 = vor.u32 %v877, %v878
        %v880 = vsub.s32 4294967266, %v875
        %v881 = vadd.s32 %v880, 127
        %v882 = vshll.u32 %v881, 23
        %v883 = vor.u32 4788187, %v882
        %v884 = vand.u32 2147483647, %v883
        %v886 = vcvt.s32.f32 %v879
        %v887 = vmul.f32 %v886, %v884
        %v888 = vxor.u32 %v887, 2147483648
        %v889 = vsel %vm806, %v888, %v887
        %v890 = vsub.s32 4, %v866
        %v891 = vsel %vm806, %v890, %v866
        %v892 = vsel %vm805, %v465, %v889
        %v893 = vsel %vm805, 0, %v891
        %v894 = vcosq.f32.pop %v892
        %v895 = vsinq.f32.pop %v892
        %vm896 = vweird.f32 %v465
        %v897 = vadd.s32 %v893, 3
        %v898 = vand.u32 %v897, 3
        %vm899 = vcmp.lt.s32.totalorder %v898, 2
        %vm900 = vcmp.eq.s32.totalorder %v898, 0
        %v901 = vxor.u32 %v895, 2147483648
        %v902 = vsel %vm900, %v894, %v901
        %vm903 = vcmp.eq.s32.totalorder %v898, 2
        %v904 = vxor.u32 %v894, 2147483648
        %v905 = vsel %vm903, %v904, %v895
        %v906 = vsel %vm899, %v902, %v905
        %v907 = vsel %vm896, nan, %v906
        %v908 = vand.u32 2147483647, %v470
        %vm909 = vcmp.le.f32.partialorder %v908, 0.7853982
        %vm910 = vcmp.lt.s32.totalorder %v470, 0
        %v911 = vand.u32 %v470, 2139095040
        %v912 = vshrl.u32 %v911, 23
        %v913 = vsub.s32 %v912, 127
        %v914 = vand.u32 2147483647, %v470
        %v915 = vand.u32 %v914, 8388607
        %v916 = vor.u32 %v915, 8388608
        %v917 = vsub.s32 0, %v916
        %v918 = vadd.s32 %v913, 1
        %vm919 = vcmp.gt.s32.totalorder %v918, 0
        %v920 = vsel %vm919, %v918, 0
        %v921 = vshrl.u32 %v920, 5
        %v922 = vand.u32 %v920, 31
        %v923 = vsub.s32 32, %v922
        %v924 = vshrl.u32 683565275, %v923
        %v925 = vshll.u32 683565275, %v922
        %v926 = vshrl.u32 2475754826, %v923
        %v927 = vor.u32 %v925, %v926
        %v928 = vshll.u32 2475754826, %v922
        %v929 = vshrl.u32 2131351028, %v923
        %v930 = vor.u32 %v928, %v929
        %v931 = vshll.u32 2131351028, %v922
        %v932 = vshrl.u32 2102212464, %v923
        %v933 = vor.u32 %v931, %v932
        %v934 = vshll.u32 2102212464, %v922
        %v935 = vshrl.u32 920167782, %v923
        %v936 = vor.u32 %v934, %v935
        %v937 = vshll.u32 920167782, %v922
        %v938 = vshrl.u32 1326507024, %v923
        %v939 = vor.u32 %v937, %v938
        %vm940 = vcmp.lt.s32.totalorder %v921, 1
        %vm941 = vcmp.lt.s32.totalorder %v921, 2
        %vm942 = vcmp.lt.s32.totalorder %v921, 3
        %vm943 = vcmp.lt.s32.totalorder %v921, 4
        %v944 = vsel %vm940, %v924, %v927
        %v945 = vsel %vm943, %v933, 2102212464
        %v946 = vsel %vm942, %v930, %v945
        %v947 = vsel %vm941, %v944, %v946
        %v948 = vsel %vm940, %v927, %v930
        %v949 = vsel %vm943, %v936, 920167782
        %v950 = vsel %vm942, %v933, %v949
        %v951 = vsel %vm941, %v948, %v950
        %v952 = vsel %vm940, %v930, %v933
        %v953 = vsel %vm943, %v939, 1326507024
        %v954 = vsel %vm942, %v936, %v953
        %v955 = vsel %vm941, %v952, %v954
        %v956 = vshll.u32 %v916, 8
        %v957 = vmul.u32.u64.compose %v956, %v955
        %v958 = vextract.low.u32 %v957
        %v959 = vextract.high.u32 %v957
        %v960 = vmul.u32.u64.compose %v956, %v951
        %v961 = vextract.low.u32 %v960
        %v962 = vextract.high.u32 %v960
        %v963 = vmul.u32 %v956, %v947
        %v964 = vadd.s32 %v959, %v961
        %vm965 = vc.u32 %v959, %v961
        %v966 = vadd.s32 %v962, 1
        %v967 = vsel %vm965, %v966, %v962
        %v968 = vadd.s32 %v963, %v967
        %v969 = vadd.s32 %v968, 536870912
        %v970 = vshrl.u32 %v969, 30
        %v971 = vshll.u32 %v970, 30
        %v972 = vsub.s32 %v968, %v971
        %vm973 = vcmp.lt.s32.totalorder %v972, 0
        %v974 = vsub.s32 0, %v972
        %v975 = vsel %vm973, %v974, %v972
        %v976 = vclz %v975
        %v977 = vsub.s32 %v976, 2
        %vm978 = vcmp.gt.s32.totalorder 0, %v977
        %v979 = vsel %vm978, 0, %v977
        %v980 = vsub.s32 32, %v979
        %v981 = vshll.u32 %v972, %v979
        %v982 = vshrl.u32 %v964, %v980
        %v983 = vor.u32 %v981, %v982
        %v984 = vsub.s32 4294967266, %v979
        %v985 = vadd.s32 %v984, 127
        %v986 = vshll.u32 %v985, 23
        %v987 = vor.u32 4788187, %v986
        %v988 = vand.u32 2147483647, %v987
        %v990 = vcvt.s32.f32 %v983
        %v991 = vmul.f32 %v990, %v988
        %v992 = vxor.u32 %v991, 2147483648
        %v993 = vsel %vm910, %v992, %v991
        %v994 = vsub.s32 4, %v970
        %v995 = vsel %vm910, %v994, %v970
        %v996 = vsel %vm909, %v470, %v993
        %v997 = vsel %vm909, 0, %v995
        %v998 = vcosq.f32.pop %v996
        %v999 = vsinq.f32.pop %v996
        %vm1000 = vweird.f32 %v470
        %v1001 = vadd.s32 %v997, 3
        %v1002 = vand.u32 %v1001, 3
        %vm1003 = vcmp.lt.s32.totalorder %v1002, 2
        %vm1004 = vcmp.eq.s32.totalorder %v1002, 0
        %v1005 = vxor.u32 %v999, 2147483648
        %v1006 = vsel %vm1004, %v998, %v1005
        %vm1007 = vcmp.eq.s32.totalorder %v1002, 2
        %v1008 = vxor.u32 %v998, 2147483648
        %v1009 = vsel %vm1007, %v1008, %v999
        %v1010 = vsel %vm1003, %v1006, %v1009
        %v1011 = vsel %vm1000, nan, %v1010
        %v1012 = vand.u32 2147483647, %v473
        %vm1013 = vcmp.le.f32.partialorder %v1012, 0.7853982
        %vm1014 = vcmp.lt.s32.totalorder %v473, 0
        %v1015 = vand.u32 %v473, 2139095040
        %v1016 = vshrl.u32 %v1015, 23
        %v1017 = vsub.s32 %v1016, 127
        %v1018 = vand.u32 2147483647, %v473
        %v1019 = vand.u32 %v1018, 8388607
        %v1020 = vor.u32 %v1019, 8388608
        %v1021 = vsub.s32 0, %v1020
        %v1022 = vadd.s32 %v1017, 1
        %vm1023 = vcmp.gt.s32.totalorder %v1022, 0
        %v1024 = vsel %vm1023, %v1022, 0
        %v1025 = vshrl.u32 %v1024, 5
        %v1026 = vand.u32 %v1024, 31
        %v1027 = vsub.s32 32, %v1026
        %v1028 = vshrl.u32 683565275, %v1027
        %v1029 = vshll.u32 683565275, %v1026
        %v1030 = vshrl.u32 2475754826, %v1027
        %v1031 = vor.u32 %v1029, %v1030
        %v1032 = vshll.u32 2475754826, %v1026
        %v1033 = vshrl.u32 2131351028, %v1027
        %v1034 = vor.u32 %v1032, %v1033
        %v1035 = vshll.u32 2131351028, %v1026
        %v1036 = vshrl.u32 2102212464, %v1027
        %v1037 = vor.u32 %v1035, %v1036
        %v1038 = vshll.u32 2102212464, %v1026
        %v1039 = vshrl.u32 920167782, %v1027
        %v1040 = vor.u32 %v1038, %v1039
        %v1041 = vshll.u32 920167782, %v1026
        %v1042 = vshrl.u32 1326507024, %v1027
        %v1043 = vor.u32 %v1041, %v1042
        %vm1044 = vcmp.lt.s32.totalorder %v1025, 1
        %vm1045 = vcmp.lt.s32.totalorder %v1025, 2
        %vm1046 = vcmp.lt.s32.totalorder %v1025, 3
        %vm1047 = vcmp.lt.s32.totalorder %v1025, 4
        %v1048 = vsel %vm1044, %v1028, %v1031
        %v1049 = vsel %vm1047, %v1037, 2102212464
        %v1050 = vsel %vm1046, %v1034, %v1049
        %v1051 = vsel %vm1045, %v1048, %v1050
        %v1052 = vsel %vm1044, %v1031, %v1034
        %v1053 = vsel %vm1047, %v1040, 920167782
        %v1054 = vsel %vm1046, %v1037, %v1053
        %v1055 = vsel %vm1045, %v1052, %v1054
        %v1056 = vsel %vm1044, %v1034, %v1037
        %v1057 = vsel %vm1047, %v1043, 1326507024
        %v1058 = vsel %vm1046, %v1040, %v1057
        %v1059 = vsel %vm1045, %v1056, %v1058
        %v1060 = vshll.u32 %v1020, 8
        %v1061 = vmul.u32.u64.compose %v1060, %v1059
        %v1062 = vextract.low.u32 %v1061
        %v1063 = vextract.high.u32 %v1061
        %v1064 = vmul.u32.u64.compose %v1060, %v1055
        %v1065 = vextract.low.u32 %v1064
        %v1066 = vextract.high.u32 %v1064
        %v1067 = vmul.u32 %v1060, %v1051
        %v1068 = vadd.s32 %v1063, %v1065
        %vm1069 = vc.u32 %v1063, %v1065
        %v1070 = vadd.s32 %v1066, 1
        %v1071 = vsel %vm1069, %v1070, %v1066
        %v1072 = vadd.s32 %v1067, %v1071
        %v1073 = vadd.s32 %v1072, 536870912
        %v1074 = vshrl.u32 %v1073, 30
        %v1075 = vshll.u32 %v1074, 30
        %v1076 = vsub.s32 %v1072, %v1075
        %vm1077 = vcmp.lt.s32.totalorder %v1076, 0
        %v1078 = vsub.s32 0, %v1076
        %v1079 = vsel %vm1077, %v1078, %v1076
        %v1080 = vclz %v1079
        %v1081 = vsub.s32 %v1080, 2
        %vm1082 = vcmp.gt.s32.totalorder 0, %v1081
        %v1083 = vsel %vm1082, 0, %v1081
        %v1084 = vsub.s32 32, %v1083
        %v1085 = vshll.u32 %v1076, %v1083
        %v1086 = vshrl.u32 %v1068, %v1084
        %v1087 = vor.u32 %v1085, %v1086
        %v1088 = vsub.s32 4294967266, %v1083
        %v1089 = vadd.s32 %v1088, 127
        %v1090 = vshll.u32 %v1089, 23
        %v1091 = vor.u32 4788187, %v1090
        %v1092 = vand.u32 2147483647, %v1091
        %v1094 = vcvt.s32.f32 %v1087
        %v1095 = vmul.f32 %v1094, %v1092
        %v1096 = vxor.u32 %v1095, 2147483648
        %v1097 = vsel %vm1014, %v1096, %v1095
        %v1098 = vsub.s32 4, %v1074
        %v1099 = vsel %vm1014, %v1098, %v1074
        %v1100 = vsel %vm1013, %v473, %v1097
        %v1101 = vsel %vm1013, 0, %v1099
        %v1102 = vcosq.f32.pop %v1100
        %v1103 = vsinq.f32.pop %v1100
        %vm1104 = vweird.f32 %v473
        %v1105 = vadd.s32 %v1101, 3
        %v1106 = vand.u32 %v1105, 3
        %vm1107 = vcmp.lt.s32.totalorder %v1106, 2
        %vm1108 = vcmp.eq.s32.totalorder %v1106, 0
        %v1109 = vxor.u32 %v1103, 2147483648
        %v1110 = vsel %vm1108, %v1102, %v1109
        %vm1111 = vcmp.eq.s32.totalorder %v1106, 2
        %v1112 = vxor.u32 %v1102, 2147483648
        %v1113 = vsel %vm1111, %v1112, %v1103
        %v1114 = vsel %vm1107, %v1110, %v1113
        %v1115 = vsel %vm1104, nan, %v1114
        %v1116 = vand.u32 2147483647, %v478
        %vm1117 = vcmp.le.f32.partialorder %v1116, 0.7853982
        %vm1118 = vcmp.lt.s32.totalorder %v478, 0
        %v1119 = vand.u32 %v478, 2139095040
        %v1120 = vshrl.u32 %v1119, 23
        %v1121 = vsub.s32 %v1120, 127
        %v1122 = vand.u32 2147483647, %v478
        %v1123 = vand.u32 %v1122, 8388607
        %v1124 = vor.u32 %v1123, 8388608
        %v1125 = vsub.s32 0, %v1124
        %v1126 = vadd.s32 %v1121, 1
        %vm1127 = vcmp.gt.s32.totalorder %v1126, 0
        %v1128 = vsel %vm1127, %v1126, 0
        %v1129 = vshrl.u32 %v1128, 5
        %v1130 = vand.u32 %v1128, 31
        %v1131 = vsub.s32 32, %v1130
        %v1132 = vshrl.u32 683565275, %v1131
        %v1133 = vshll.u32 683565275, %v1130
        %v1134 = vshrl.u32 2475754826, %v1131
        %v1135 = vor.u32 %v1133, %v1134
        %v1136 = vshll.u32 2475754826, %v1130
        %v1137 = vshrl.u32 2131351028, %v1131
        %v1138 = vor.u32 %v1136, %v1137
        %v1139 = vshll.u32 2131351028, %v1130
        %v1140 = vshrl.u32 2102212464, %v1131
        %v1141 = vor.u32 %v1139, %v1140
        %v1142 = vshll.u32 2102212464, %v1130
        %v1143 = vshrl.u32 920167782, %v1131
        %v1144 = vor.u32 %v1142, %v1143
        %v1145 = vshll.u32 920167782, %v1130
        %v1146 = vshrl.u32 1326507024, %v1131
        %v1147 = vor.u32 %v1145, %v1146
        %vm1148 = vcmp.lt.s32.totalorder %v1129, 1
        %vm1149 = vcmp.lt.s32.totalorder %v1129, 2
        %vm1150 = vcmp.lt.s32.totalorder %v1129, 3
        %vm1151 = vcmp.lt.s32.totalorder %v1129, 4
        %v1152 = vsel %vm1148, %v1132, %v1135
        %v1153 = vsel %vm1151, %v1141, 2102212464
        %v1154 = vsel %vm1150, %v1138, %v1153
        %v1155 = vsel %vm1149, %v1152, %v1154
        %v1156 = vsel %vm1148, %v1135, %v1138
        %v1157 = vsel %vm1151, %v1144, 920167782
        %v1158 = vsel %vm1150, %v1141, %v1157
        %v1159 = vsel %vm1149, %v1156, %v1158
        %v1160 = vsel %vm1148, %v1138, %v1141
        %v1161 = vsel %vm1151, %v1147, 1326507024
        %v1162 = vsel %vm1150, %v1144, %v1161
        %v1163 = vsel %vm1149, %v1160, %v1162
        %v1164 = vshll.u32 %v1124, 8
        %v1165 = vmul.u32.u64.compose %v1164, %v1163
        %v1166 = vextract.low.u32 %v1165
        %v1167 = vextract.high.u32 %v1165
        %v1168 = vmul.u32.u64.compose %v1164, %v1159
        %v1169 = vextract.low.u32 %v1168
        %v1170 = vextract.high.u32 %v1168
        %v1171 = vmul.u32 %v1164, %v1155
        %v1172 = vadd.s32 %v1167, %v1169
        %vm1173 = vc.u32 %v1167, %v1169
        %v1174 = vadd.s32 %v1170, 1
        %v1175 = vsel %vm1173, %v1174, %v1170
        %v1176 = vadd.s32 %v1171, %v1175
        %v1177 = vadd.s32 %v1176, 536870912
        %v1178 = vshrl.u32 %v1177, 30
        %v1179 = vshll.u32 %v1178, 30
        %v1180 = vsub.s32 %v1176, %v1179
        %vm1181 = vcmp.lt.s32.totalorder %v1180, 0
        %v1182 = vsub.s32 0, %v1180
        %v1183 = vsel %vm1181, %v1182, %v1180
        %v1184 = vclz %v1183
        %v1185 = vsub.s32 %v1184, 2
        %vm1186 = vcmp.gt.s32.totalorder 0, %v1185
        %v1187 = vsel %vm1186, 0, %v1185
        %v1188 = vsub.s32 32, %v1187
        %v1189 = vshll.u32 %v1180, %v1187
        %v1190 = vshrl.u32 %v1172, %v1188
        %v1191 = vor.u32 %v1189, %v1190
        %v1192 = vsub.s32 4294967266, %v1187
        %v1193 = vadd.s32 %v1192, 127
        %v1194 = vshll.u32 %v1193, 23
        %v1195 = vor.u32 4788187, %v1194
        %v1196 = vand.u32 2147483647, %v1195
        %v1198 = vcvt.s32.f32 %v1191
        %v1199 = vmul.f32 %v1198, %v1196
        %v1200 = vxor.u32 %v1199, 2147483648
        %v1201 = vsel %vm1118, %v1200, %v1199
        %v1202 = vsub.s32 4, %v1178
        %v1203 = vsel %vm1118, %v1202, %v1178
        %v1204 = vsel %vm1117, %v478, %v1201
        %v1205 = vsel %vm1117, 0, %v1203
        %v1206 = vcosq.f32.pop %v1204
        %v1207 = vsinq.f32.pop %v1204
        %vm1208 = vweird.f32 %v478
        %v1209 = vadd.s32 %v1205, 3
        %v1210 = vand.u32 %v1209, 3
        %vm1211 = vcmp.lt.s32.totalorder %v1210, 2
        %vm1212 = vcmp.eq.s32.totalorder %v1210, 0
        %v1213 = vxor.u32 %v1207, 2147483648
        %v1214 = vsel %vm1212, %v1206, %v1213
        %vm1215 = vcmp.eq.s32.totalorder %v1210, 2
        %v1216 = vxor.u32 %v1206, 2147483648
        %v1217 = vsel %vm1215, %v1216, %v1207
        %v1218 = vsel %vm1211, %v1214, %v1217
        %v1219 = vsel %vm1208, nan, %v1218
        %v1220 = vand.u32 2147483647, %v481
        %vm1221 = vcmp.le.f32.partialorder %v1220, 0.7853982
        %vm1222 = vcmp.lt.s32.totalorder %v481, 0
        %v1223 = vand.u32 %v481, 2139095040
        %v1224 = vshrl.u32 %v1223, 23
        %v1225 = vsub.s32 %v1224, 127
        %v1226 = vand.u32 2147483647, %v481
        %v1227 = vand.u32 %v1226, 8388607
        %v1228 = vor.u32 %v1227, 8388608
        %v1229 = vsub.s32 0, %v1228
        %v1230 = vadd.s32 %v1225, 1
        %vm1231 = vcmp.gt.s32.totalorder %v1230, 0
        %v1232 = vsel %vm1231, %v1230, 0
        %v1233 = vshrl.u32 %v1232, 5
        %v1234 = vand.u32 %v1232, 31
        %v1235 = vsub.s32 32, %v1234
        %v1236 = vshrl.u32 683565275, %v1235
        %v1237 = vshll.u32 683565275, %v1234
        %v1238 = vshrl.u32 2475754826, %v1235
        %v1239 = vor.u32 %v1237, %v1238
        %v1240 = vshll.u32 2475754826, %v1234
        %v1241 = vshrl.u32 2131351028, %v1235
        %v1242 = vor.u32 %v1240, %v1241
        %v1243 = vshll.u32 2131351028, %v1234
        %v1244 = vshrl.u32 2102212464, %v1235
        %v1245 = vor.u32 %v1243, %v1244
        %v1246 = vshll.u32 2102212464, %v1234
        %v1247 = vshrl.u32 920167782, %v1235
        %v1248 = vor.u32 %v1246, %v1247
        %v1249 = vshll.u32 920167782, %v1234
        %v1250 = vshrl.u32 1326507024, %v1235
        %v1251 = vor.u32 %v1249, %v1250
        %vm1252 = vcmp.lt.s32.totalorder %v1233, 1
        %vm1253 = vcmp.lt.s32.totalorder %v1233, 2
        %vm1254 = vcmp.lt.s32.totalorder %v1233, 3
        %vm1255 = vcmp.lt.s32.totalorder %v1233, 4
        %v1256 = vsel %vm1252, %v1236, %v1239
        %v1257 = vsel %vm1255, %v1245, 2102212464
        %v1258 = vsel %vm1254, %v1242, %v1257
        %v1259 = vsel %vm1253, %v1256, %v1258
        %v1260 = vsel %vm1252, %v1239, %v1242
        %v1261 = vsel %vm1255, %v1248, 920167782
        %v1262 = vsel %vm1254, %v1245, %v1261
        %v1263 = vsel %vm1253, %v1260, %v1262
        %v1264 = vsel %vm1252, %v1242, %v1245
        %v1265 = vsel %vm1255, %v1251, 1326507024
        %v1266 = vsel %vm1254, %v1248, %v1265
        %v1267 = vsel %vm1253, %v1264, %v1266
        %v1268 = vshll.u32 %v1228, 8
        %v1269 = vmul.u32.u64.compose %v1268, %v1267
        %v1270 = vextract.low.u32 %v1269
        %v1271 = vextract.high.u32 %v1269
        %v1272 = vmul.u32.u64.compose %v1268, %v1263
        %v1273 = vextract.low.u32 %v1272
        %v1274 = vextract.high.u32 %v1272
        %v1275 = vmul.u32 %v1268, %v1259
        %v1276 = vadd.s32 %v1271, %v1273
        %vm1277 = vc.u32 %v1271, %v1273
        %v1278 = vadd.s32 %v1274, 1
        %v1279 = vsel %vm1277, %v1278, %v1274
        %v1280 = vadd.s32 %v1275, %v1279
        %v1281 = vadd.s32 %v1280, 536870912
        %v1282 = vshrl.u32 %v1281, 30
        %v1283 = vshll.u32 %v1282, 30
        %v1284 = vsub.s32 %v1280, %v1283
        %vm1285 = vcmp.lt.s32.totalorder %v1284, 0
        %v1286 = vsub.s32 0, %v1284
        %v1287 = vsel %vm1285, %v1286, %v1284
        %v1288 = vclz %v1287
        %v1289 = vsub.s32 %v1288, 2
        %vm1290 = vcmp.gt.s32.totalorder 0, %v1289
        %v1291 = vsel %vm1290, 0, %v1289
        %v1292 = vsub.s32 32, %v1291
        %v1293 = vshll.u32 %v1284, %v1291
        %v1294 = vshrl.u32 %v1276, %v1292
        %v1295 = vor.u32 %v1293, %v1294
        %v1296 = vsub.s32 4294967266, %v1291
        %v1297 = vadd.s32 %v1296, 127
        %v1298 = vshll.u32 %v1297, 23
        %v1299 = vor.u32 4788187, %v1298
        %v1300 = vand.u32 2147483647, %v1299
        %v1302 = vcvt.s32.f32 %v1295
        %v1303 = vmul.f32 %v1302, %v1300
        %v1304 = vxor.u32 %v1303, 2147483648
        %v1305 = vsel %vm1222, %v1304, %v1303
        %v1306 = vsub.s32 4, %v1282
        %v1307 = vsel %vm1222, %v1306, %v1282
        %v1308 = vsel %vm1221, %v481, %v1305
        %v1309 = vsel %vm1221, 0, %v1307
        %v1310 = vcosq.f32.pop %v1308
        %v1311 = vsinq.f32.pop %v1308
        %vm1312 = vweird.f32 %v481
        %v1313 = vadd.s32 %v1309, 3
        %v1314 = vand.u32 %v1313, 3
        %vm1315 = vcmp.lt.s32.totalorder %v1314, 2
        %vm1316 = vcmp.eq.s32.totalorder %v1314, 0
        %v1317 = vxor.u32 %v1311, 2147483648
        %v1318 = vsel %vm1316, %v1310, %v1317
        %vm1319 = vcmp.eq.s32.totalorder %v1314, 2
        %v1320 = vxor.u32 %v1310, 2147483648
        %v1321 = vsel %vm1319, %v1320, %v1311
        %v1322 = vsel %vm1315, %v1318, %v1321
        %v1323 = vsel %vm1312, nan, %v1322
        %v1324 = vand.u32 2147483647, %v454
        %vm1325 = vcmp.le.f32.partialorder %v1324, 0.7853982
        %vm1326 = vcmp.lt.s32.totalorder %v454, 0
        %v1327 = vand.u32 %v454, 2139095040
        %v1328 = vshrl.u32 %v1327, 23
        %v1329 = vsub.s32 %v1328, 127
        %v1330 = vand.u32 2147483647, %v454
        %v1331 = vand.u32 %v1330, 8388607
        %v1332 = vor.u32 %v1331, 8388608
        %v1333 = vsub.s32 0, %v1332
        %v1334 = vadd.s32 %v1329, 1
        %vm1335 = vcmp.gt.s32.totalorder %v1334, 0
        %v1336 = vsel %vm1335, %v1334, 0
        %v1337 = vshrl.u32 %v1336, 5
        %v1338 = vand.u32 %v1336, 31
        %v1339 = vsub.s32 32, %v1338
        %v1340 = vshrl.u32 683565275, %v1339
        %v1341 = vshll.u32 683565275, %v1338
        %v1342 = vshrl.u32 2475754826, %v1339
        %v1343 = vor.u32 %v1341, %v1342
        %v1344 = vshll.u32 2475754826, %v1338
        %v1345 = vshrl.u32 2131351028, %v1339
        %v1346 = vor.u32 %v1344, %v1345
        %v1347 = vshll.u32 2131351028, %v1338
        %v1348 = vshrl.u32 2102212464, %v1339
        %v1349 = vor.u32 %v1347, %v1348
        %v1350 = vshll.u32 2102212464, %v1338
        %v1351 = vshrl.u32 920167782, %v1339
        %v1352 = vor.u32 %v1350, %v1351
        %v1353 = vshll.u32 920167782, %v1338
        %v1354 = vshrl.u32 1326507024, %v1339
        %v1355 = vor.u32 %v1353, %v1354
        %vm1356 = vcmp.lt.s32.totalorder %v1337, 1
        %vm1357 = vcmp.lt.s32.totalorder %v1337, 2
        %vm1358 = vcmp.lt.s32.totalorder %v1337, 3
        %vm1359 = vcmp.lt.s32.totalorder %v1337, 4
        %v1360 = vsel %vm1356, %v1340, %v1343
        %v1361 = vsel %vm1359, %v1349, 2102212464
        %v1362 = vsel %vm1358, %v1346, %v1361
        %v1363 = vsel %vm1357, %v1360, %v1362
        %v1364 = vsel %vm1356, %v1343, %v1346
        %v1365 = vsel %vm1359, %v1352, 920167782
        %v1366 = vsel %vm1358, %v1349, %v1365
        %v1367 = vsel %vm1357, %v1364, %v1366
        %v1368 = vsel %vm1356, %v1346, %v1349
        %v1369 = vsel %vm1359, %v1355, 1326507024
        %v1370 = vsel %vm1358, %v1352, %v1369
        %v1371 = vsel %vm1357, %v1368, %v1370
        %v1372 = vshll.u32 %v1332, 8
        %v1373 = vmul.u32.u64.compose %v1372, %v1371
        %v1374 = vextract.low.u32 %v1373
        %v1375 = vextract.high.u32 %v1373
        %v1376 = vmul.u32.u64.compose %v1372, %v1367
        %v1377 = vextract.low.u32 %v1376
        %v1378 = vextract.high.u32 %v1376
        %v1379 = vmul.u32 %v1372, %v1363
        %v1380 = vadd.s32 %v1375, %v1377
        %vm1381 = vc.u32 %v1375, %v1377
        %v1382 = vadd.s32 %v1378, 1
        %v1383 = vsel %vm1381, %v1382, %v1378
        %v1384 = vadd.s32 %v1379, %v1383
        %v1385 = vadd.s32 %v1384, 536870912
        %v1386 = vshrl.u32 %v1385, 30
        %v1387 = vshll.u32 %v1386, 30
        %v1388 = vsub.s32 %v1384, %v1387
        %vm1389 = vcmp.lt.s32.totalorder %v1388, 0
        %v1390 = vsub.s32 0, %v1388
        %v1391 = vsel %vm1389, %v1390, %v1388
        %v1392 = vclz %v1391
        %v1393 = vsub.s32 %v1392, 2
        %vm1394 = vcmp.gt.s32.totalorder 0, %v1393
        %v1395 = vsel %vm1394, 0, %v1393
        %v1396 = vsub.s32 32, %v1395
        %v1397 = vshll.u32 %v1388, %v1395
        %v1398 = vshrl.u32 %v1380, %v1396
        %v1399 = vor.u32 %v1397, %v1398
        %v1400 = vsub.s32 4294967266, %v1395
        %v1401 = vadd.s32 %v1400, 127
        %v1402 = vshll.u32 %v1401, 23
        %v1403 = vor.u32 4788187, %v1402
        %v1404 = vand.u32 2147483647, %v1403
        %v1406 = vcvt.s32.f32 %v1399
        %v1407 = vmul.f32 %v1406, %v1404
        %v1408 = vxor.u32 %v1407, 2147483648
        %v1409 = vsel %vm1326, %v1408, %v1407
        %v1410 = vsub.s32 4, %v1386
        %v1411 = vsel %vm1326, %v1410, %v1386
        %v1412 = vsel %vm1325, %v454, %v1409
        %v1413 = vsel %vm1325, 0, %v1411
        %v1414 = vcosq.f32.pop %v1412
        %v1415 = vsinq.f32.pop %v1412
        %vm1416 = vweird.f32 %v454
        %v1417 = vand.u32 %v1413, 3
        %vm1418 = vcmp.lt.s32.totalorder %v1417, 2
        %vm1419 = vcmp.eq.s32.totalorder %v1417, 0
        %v1420 = vxor.u32 %v1415, 2147483648
        %v1421 = vsel %vm1419, %v1414, %v1420
        %vm1422 = vcmp.eq.s32.totalorder %v1417, 2
        %v1423 = vxor.u32 %v1414, 2147483648
        %v1424 = vsel %vm1422, %v1423, %v1415
        %v1425 = vsel %vm1418, %v1421, %v1424
        %v1426 = vsel %vm1416, nan, %v1425
        %v1427 = vand.u32 2147483647, %v457
        %vm1428 = vcmp.le.f32.partialorder %v1427, 0.7853982
        %vm1429 = vcmp.lt.s32.totalorder %v457, 0
        %v1430 = vand.u32 %v457, 2139095040
        %v1431 = vshrl.u32 %v1430, 23
        %v1432 = vsub.s32 %v1431, 127
        %v1433 = vand.u32 2147483647, %v457
        %v1434 = vand.u32 %v1433, 8388607
        %v1435 = vor.u32 %v1434, 8388608
        %v1436 = vsub.s32 0, %v1435
        %v1437 = vadd.s32 %v1432, 1
        %vm1438 = vcmp.gt.s32.totalorder %v1437, 0
        %v1439 = vsel %vm1438, %v1437, 0
        %v1440 = vshrl.u32 %v1439, 5
        %v1441 = vand.u32 %v1439, 31
        %v1442 = vsub.s32 32, %v1441
        %v1443 = vshrl.u32 683565275, %v1442
        %v1444 = vshll.u32 683565275, %v1441
        %v1445 = vshrl.u32 2475754826, %v1442
        %v1446 = vor.u32 %v1444, %v1445
        %v1447 = vshll.u32 2475754826, %v1441
        %v1448 = vshrl.u32 2131351028, %v1442
        %v1449 = vor.u32 %v1447, %v1448
        %v1450 = vshll.u32 2131351028, %v1441
        %v1451 = vshrl.u32 2102212464, %v1442
        %v1452 = vor.u32 %v1450, %v1451
        %v1453 = vshll.u32 2102212464, %v1441
        %v1454 = vshrl.u32 920167782, %v1442
        %v1455 = vor.u32 %v1453, %v1454
        %v1456 = vshll.u32 920167782, %v1441
        %v1457 = vshrl.u32 1326507024, %v1442
        %v1458 = vor.u32 %v1456, %v1457
        %vm1459 = vcmp.lt.s32.totalorder %v1440, 1
        %vm1460 = vcmp.lt.s32.totalorder %v1440, 2
        %vm1461 = vcmp.lt.s32.totalorder %v1440, 3
        %vm1462 = vcmp.lt.s32.totalorder %v1440, 4
        %v1463 = vsel %vm1459, %v1443, %v1446
        %v1464 = vsel %vm1462, %v1452, 2102212464
        %v1465 = vsel %vm1461, %v1449, %v1464
        %v1466 = vsel %vm1460, %v1463, %v1465
        %v1467 = vsel %vm1459, %v1446, %v1449
        %v1468 = vsel %vm1462, %v1455, 920167782
        %v1469 = vsel %vm1461, %v1452, %v1468
        %v1470 = vsel %vm1460, %v1467, %v1469
        %v1471 = vsel %vm1459, %v1449, %v1452
        %v1472 = vsel %vm1462, %v1458, 1326507024
        %v1473 = vsel %vm1461, %v1455, %v1472
        %v1474 = vsel %vm1460, %v1471, %v1473
        %v1475 = vshll.u32 %v1435, 8
        %v1476 = vmul.u32.u64.compose %v1475, %v1474
        %v1477 = vextract.low.u32 %v1476
        %v1478 = vextract.high.u32 %v1476
        %v1479 = vmul.u32.u64.compose %v1475, %v1470
        %v1480 = vextract.low.u32 %v1479
        %v1481 = vextract.high.u32 %v1479
        %v1482 = vmul.u32 %v1475, %v1466
        %v1483 = vadd.s32 %v1478, %v1480
        %vm1484 = vc.u32 %v1478, %v1480
        %v1485 = vadd.s32 %v1481, 1
        %v1486 = vsel %vm1484, %v1485, %v1481
        %v1487 = vadd.s32 %v1482, %v1486
        %v1488 = vadd.s32 %v1487, 536870912
        %v1489 = vshrl.u32 %v1488, 30
        %v1490 = vshll.u32 %v1489, 30
        %v1491 = vsub.s32 %v1487, %v1490
        %vm1492 = vcmp.lt.s32.totalorder %v1491, 0
        %v1493 = vsub.s32 0, %v1491
        %v1494 = vsel %vm1492, %v1493, %v1491
        %v1495 = vclz %v1494
        %v1496 = vsub.s32 %v1495, 2
        %vm1497 = vcmp.gt.s32.totalorder 0, %v1496
        %v1498 = vsel %vm1497, 0, %v1496
        %v1499 = vsub.s32 32, %v1498
        %v1500 = vshll.u32 %v1491, %v1498
        %v1501 = vshrl.u32 %v1483, %v1499
        %v1502 = vor.u32 %v1500, %v1501
        %v1503 = vsub.s32 4294967266, %v1498
        %v1504 = vadd.s32 %v1503, 127
        %v1505 = vshll.u32 %v1504, 23
        %v1506 = vor.u32 4788187, %v1505
        %v1507 = vand.u32 2147483647, %v1506
        %v1509 = vcvt.s32.f32 %v1502
        %v1510 = vmul.f32 %v1509, %v1507
        %v1511 = vxor.u32 %v1510, 2147483648
        %v1512 = vsel %vm1429, %v1511, %v1510
        %v1513 = vsub.s32 4, %v1489
        %v1514 = vsel %vm1429, %v1513, %v1489
        %v1515 = vsel %vm1428, %v457, %v1512
        %v1516 = vsel %vm1428, 0, %v1514
        %v1517 = vcosq.f32.pop %v1515
        %v1518 = vsinq.f32.pop %v1515
        %vm1519 = vweird.f32 %v457
        %v1520 = vand.u32 %v1516, 3
        %vm1521 = vcmp.lt.s32.totalorder %v1520, 2
        %vm1522 = vcmp.eq.s32.totalorder %v1520, 0
        %v1523 = vxor.u32 %v1518, 2147483648
        %v1524 = vsel %vm1522, %v1517, %v1523
        %vm1525 = vcmp.eq.s32.totalorder %v1520, 2
        %v1526 = vxor.u32 %v1517, 2147483648
        %v1527 = vsel %vm1525, %v1526, %v1518
        %v1528 = vsel %vm1521, %v1524, %v1527
        %v1529 = vsel %vm1519, nan, %v1528
        %v1530 = vand.u32 2147483647, %v462
        %vm1531 = vcmp.le.f32.partialorder %v1530, 0.7853982
        %vm1532 = vcmp.lt.s32.totalorder %v462, 0
        %v1533 = vand.u32 %v462, 2139095040
        %v1534 = vshrl.u32 %v1533, 23
        %v1535 = vsub.s32 %v1534, 127
        %v1536 = vand.u32 2147483647, %v462
        %v1537 = vand.u32 %v1536, 8388607
        %v1538 = vor.u32 %v1537, 8388608
        %v1539 = vsub.s32 0, %v1538
        %v1540 = vadd.s32 %v1535, 1
        %vm1541 = vcmp.gt.s32.totalorder %v1540, 0
        %v1542 = vsel %vm1541, %v1540, 0
        %v1543 = vshrl.u32 %v1542, 5
        %v1544 = vand.u32 %v1542, 31
        %v1545 = vsub.s32 32, %v1544
        %v1546 = vshrl.u32 683565275, %v1545
        %v1547 = vshll.u32 683565275, %v1544
        %v1548 = vshrl.u32 2475754826, %v1545
        %v1549 = vor.u32 %v1547, %v1548
        %v1550 = vshll.u32 2475754826, %v1544
        %v1551 = vshrl.u32 2131351028, %v1545
        %v1552 = vor.u32 %v1550, %v1551
        %v1553 = vshll.u32 2131351028, %v1544
        %v1554 = vshrl.u32 2102212464, %v1545
        %v1555 = vor.u32 %v1553, %v1554
        %v1556 = vshll.u32 2102212464, %v1544
        %v1557 = vshrl.u32 920167782, %v1545
        %v1558 = vor.u32 %v1556, %v1557
        %v1559 = vshll.u32 920167782, %v1544
        %v1560 = vshrl.u32 1326507024, %v1545
        %v1561 = vor.u32 %v1559, %v1560
        %vm1562 = vcmp.lt.s32.totalorder %v1543, 1
        %vm1563 = vcmp.lt.s32.totalorder %v1543, 2
        %vm1564 = vcmp.lt.s32.totalorder %v1543, 3
        %vm1565 = vcmp.lt.s32.totalorder %v1543, 4
        %v1566 = vsel %vm1562, %v1546, %v1549
        %v1567 = vsel %vm1565, %v1555, 2102212464
        %v1568 = vsel %vm1564, %v1552, %v1567
        %v1569 = vsel %vm1563, %v1566, %v1568
        %v1570 = vsel %vm1562, %v1549, %v1552
        %v1571 = vsel %vm1565, %v1558, 920167782
        %v1572 = vsel %vm1564, %v1555, %v1571
        %v1573 = vsel %vm1563, %v1570, %v1572
        %v1574 = vsel %vm1562, %v1552, %v1555
        %v1575 = vsel %vm1565, %v1561, 1326507024
        %v1576 = vsel %vm1564, %v1558, %v1575
        %v1577 = vsel %vm1563, %v1574, %v1576
        %v1578 = vshll.u32 %v1538, 8
        %v1579 = vmul.u32.u64.compose %v1578, %v1577
        %v1580 = vextract.low.u32 %v1579
        %v1581 = vextract.high.u32 %v1579
        %v1582 = vmul.u32.u64.compose %v1578, %v1573
        %v1583 = vextract.low.u32 %v1582
        %v1584 = vextract.high.u32 %v1582
        %v1585 = vmul.u32 %v1578, %v1569
        %v1586 = vadd.s32 %v1581, %v1583
        %vm1587 = vc.u32 %v1581, %v1583
        %v1588 = vadd.s32 %v1584, 1
        %v1589 = vsel %vm1587, %v1588, %v1584
        %v1590 = vadd.s32 %v1585, %v1589
        %v1591 = vadd.s32 %v1590, 536870912
        %v1592 = vshrl.u32 %v1591, 30
        %v1593 = vshll.u32 %v1592, 30
        %v1594 = vsub.s32 %v1590, %v1593
        %vm1595 = vcmp.lt.s32.totalorder %v1594, 0
        %v1596 = vsub.s32 0, %v1594
        %v1597 = vsel %vm1595, %v1596, %v1594
        %v1598 = vclz %v1597
        %v1599 = vsub.s32 %v1598, 2
        %vm1600 = vcmp.gt.s32.totalorder 0, %v1599
        %v1601 = vsel %vm1600, 0, %v1599
        %v1602 = vsub.s32 32, %v1601
        %v1603 = vshll.u32 %v1594, %v1601
        %v1604 = vshrl.u32 %v1586, %v1602
        %v1605 = vor.u32 %v1603, %v1604
        %v1606 = vsub.s32 4294967266, %v1601
        %v1607 = vadd.s32 %v1606, 127
        %v1608 = vshll.u32 %v1607, 23
        %v1609 = vor.u32 4788187, %v1608
        %v1610 = vand.u32 2147483647, %v1609
        %v1612 = vcvt.s32.f32 %v1605
        %v1613 = vmul.f32 %v1612, %v1610
        %v1614 = vxor.u32 %v1613, 2147483648
        %v1615 = vsel %vm1532, %v1614, %v1613
        %v1616 = vsub.s32 4, %v1592
        %v1617 = vsel %vm1532, %v1616, %v1592
        %v1618 = vsel %vm1531, %v462, %v1615
        %v1619 = vsel %vm1531, 0, %v1617
        %v1620 = vcosq.f32.pop %v1618
        %v1621 = vsinq.f32.pop %v1618
        %vm1622 = vweird.f32 %v462
        %v1623 = vand.u32 %v1619, 3
        %vm1624 = vcmp.lt.s32.totalorder %v1623, 2
        %vm1625 = vcmp.eq.s32.totalorder %v1623, 0
        %v1626 = vxor.u32 %v1621, 2147483648
        %v1627 = vsel %vm1625, %v1620, %v1626
        %vm1628 = vcmp.eq.s32.totalorder %v1623, 2
        %v1629 = vxor.u32 %v1620, 2147483648
        %v1630 = vsel %vm1628, %v1629, %v1621
        %v1631 = vsel %vm1624, %v1627, %v1630
        %v1632 = vsel %vm1622, nan, %v1631
        %v1633 = vand.u32 2147483647, %v465
        %vm1634 = vcmp.le.f32.partialorder %v1633, 0.7853982
        %vm1635 = vcmp.lt.s32.totalorder %v465, 0
        %v1636 = vand.u32 %v465, 2139095040
        %v1637 = vshrl.u32 %v1636, 23
        %v1638 = vsub.s32 %v1637, 127
        %v1639 = vand.u32 2147483647, %v465
        %v1640 = vand.u32 %v1639, 8388607
        %v1641 = vor.u32 %v1640, 8388608
        %v1642 = vsub.s32 0, %v1641
        %v1643 = vadd.s32 %v1638, 1
        %vm1644 = vcmp.gt.s32.totalorder %v1643, 0
        %v1645 = vsel %vm1644, %v1643, 0
        %v1646 = vshrl.u32 %v1645, 5
        %v1647 = vand.u32 %v1645, 31
        %v1648 = vsub.s32 32, %v1647
        %v1649 = vshrl.u32 683565275, %v1648
        %v1650 = vshll.u32 683565275, %v1647
        %v1651 = vshrl.u32 2475754826, %v1648
        %v1652 = vor.u32 %v1650, %v1651
        %v1653 = vshll.u32 2475754826, %v1647
        %v1654 = vshrl.u32 2131351028, %v1648
        %v1655 = vor.u32 %v1653, %v1654
        %v1656 = vshll.u32 2131351028, %v1647
        %v1657 = vshrl.u32 2102212464, %v1648
        %v1658 = vor.u32 %v1656, %v1657
        %v1659 = vshll.u32 2102212464, %v1647
        %v1660 = vshrl.u32 920167782, %v1648
        %v1661 = vor.u32 %v1659, %v1660
        %v1662 = vshll.u32 920167782, %v1647
        %v1663 = vshrl.u32 1326507024, %v1648
        %v1664 = vor.u32 %v1662, %v1663
        %vm1665 = vcmp.lt.s32.totalorder %v1646, 1
        %vm1666 = vcmp.lt.s32.totalorder %v1646, 2
        %vm1667 = vcmp.lt.s32.totalorder %v1646, 3
        %vm1668 = vcmp.lt.s32.totalorder %v1646, 4
        %v1669 = vsel %vm1665, %v1649, %v1652
        %v1670 = vsel %vm1668, %v1658, 2102212464
        %v1671 = vsel %vm1667, %v1655, %v1670
        %v1672 = vsel %vm1666, %v1669, %v1671
        %v1673 = vsel %vm1665, %v1652, %v1655
        %v1674 = vsel %vm1668, %v1661, 920167782
        %v1675 = vsel %vm1667, %v1658, %v1674
        %v1676 = vsel %vm1666, %v1673, %v1675
        %v1677 = vsel %vm1665, %v1655, %v1658
        %v1678 = vsel %vm1668, %v1664, 1326507024
        %v1679 = vsel %vm1667, %v1661, %v1678
        %v1680 = vsel %vm1666, %v1677, %v1679
        %v1681 = vshll.u32 %v1641, 8
        %v1682 = vmul.u32.u64.compose %v1681, %v1680
        %v1683 = vextract.low.u32 %v1682
        %v1684 = vextract.high.u32 %v1682
        %v1685 = vmul.u32.u64.compose %v1681, %v1676
        %v1686 = vextract.low.u32 %v1685
        %v1687 = vextract.high.u32 %v1685
        %v1688 = vmul.u32 %v1681, %v1672
        %v1689 = vadd.s32 %v1684, %v1686
        %vm1690 = vc.u32 %v1684, %v1686
        %v1691 = vadd.s32 %v1687, 1
        %v1692 = vsel %vm1690, %v1691, %v1687
        %v1693 = vadd.s32 %v1688, %v1692
        %v1694 = vadd.s32 %v1693, 536870912
        %v1695 = vshrl.u32 %v1694, 30
        %v1696 = vshll.u32 %v1695, 30
        %v1697 = vsub.s32 %v1693, %v1696
        %vm1698 = vcmp.lt.s32.totalorder %v1697, 0
        %v1699 = vsub.s32 0, %v1697
        %v1700 = vsel %vm1698, %v1699, %v1697
        %v1701 = vclz %v1700
        %v1702 = vsub.s32 %v1701, 2
        %vm1703 = vcmp.gt.s32.totalorder 0, %v1702
        %v1704 = vsel %vm1703, 0, %v1702
        %v1705 = vsub.s32 32, %v1704
        %v1706 = vshll.u32 %v1697, %v1704
        %v1707 = vshrl.u32 %v1689, %v1705
        %v1708 = vor.u32 %v1706, %v1707
        %v1709 = vsub.s32 4294967266, %v1704
        %v1710 = vadd.s32 %v1709, 127
        %v1711 = vshll.u32 %v1710, 23
        %v1712 = vor.u32 4788187, %v1711
        %v1713 = vand.u32 2147483647, %v1712
        %v1715 = vcvt.s32.f32 %v1708
        %v1716 = vmul.f32 %v1715, %v1713
        %v1717 = vxor.u32 %v1716, 2147483648
        %v1718 = vsel %vm1635, %v1717, %v1716
        %v1719 = vsub.s32 4, %v1695
        %v1720 = vsel %vm1635, %v1719, %v1695
        %v1721 = vsel %vm1634, %v465, %v1718
        %v1722 = vsel %vm1634, 0, %v1720
        %v1723 = vcosq.f32.pop %v1721
        %v1724 = vsinq.f32.pop %v1721
        %vm1725 = vweird.f32 %v465
        %v1726 = vand.u32 %v1722, 3
        %vm1727 = vcmp.lt.s32.totalorder %v1726, 2
        %vm1728 = vcmp.eq.s32.totalorder %v1726, 0
        %v1729 = vxor.u32 %v1724, 2147483648
        %v1730 = vsel %vm1728, %v1723, %v1729
        %vm1731 = vcmp.eq.s32.totalorder %v1726, 2
        %v1732 = vxor.u32 %v1723, 2147483648
        %v1733 = vsel %vm1731, %v1732, %v1724
        %v1734 = vsel %vm1727, %v1730, %v1733
        %v1735 = vsel %vm1725, nan, %v1734
        %v1736 = vand.u32 2147483647, %v470
        %vm1737 = vcmp.le.f32.partialorder %v1736, 0.7853982
        %vm1738 = vcmp.lt.s32.totalorder %v470, 0
        %v1739 = vand.u32 %v470, 2139095040
        %v1740 = vshrl.u32 %v1739, 23
        %v1741 = vsub.s32 %v1740, 127
        %v1742 = vand.u32 2147483647, %v470
        %v1743 = vand.u32 %v1742, 8388607
        %v1744 = vor.u32 %v1743, 8388608
        %v1745 = vsub.s32 0, %v1744
        %v1746 = vadd.s32 %v1741, 1
        %vm1747 = vcmp.gt.s32.totalorder %v1746, 0
        %v1748 = vsel %vm1747, %v1746, 0
        %v1749 = vshrl.u32 %v1748, 5
        %v1750 = vand.u32 %v1748, 31
        %v1751 = vsub.s32 32, %v1750
        %v1752 = vshrl.u32 683565275, %v1751
        %v1753 = vshll.u32 683565275, %v1750
        %v1754 = vshrl.u32 2475754826, %v1751
        %v1755 = vor.u32 %v1753, %v1754
        %v1756 = vshll.u32 2475754826, %v1750
        %v1757 = vshrl.u32 2131351028, %v1751
        %v1758 = vor.u32 %v1756, %v1757
        %v1759 = vshll.u32 2131351028, %v1750
        %v1760 = vshrl.u32 2102212464, %v1751
        %v1761 = vor.u32 %v1759, %v1760
        %v1762 = vshll.u32 2102212464, %v1750
        %v1763 = vshrl.u32 920167782, %v1751
        %v1764 = vor.u32 %v1762, %v1763
        %v1765 = vshll.u32 920167782, %v1750
        %v1766 = vshrl.u32 1326507024, %v1751
        %v1767 = vor.u32 %v1765, %v1766
        %vm1768 = vcmp.lt.s32.totalorder %v1749, 1
        %vm1769 = vcmp.lt.s32.totalorder %v1749, 2
        %vm1770 = vcmp.lt.s32.totalorder %v1749, 3
        %vm1771 = vcmp.lt.s32.totalorder %v1749, 4
        %v1772 = vsel %vm1768, %v1752, %v1755
        %v1773 = vsel %vm1771, %v1761, 2102212464
        %v1774 = vsel %vm1770, %v1758, %v1773
        %v1775 = vsel %vm1769, %v1772, %v1774
        %v1776 = vsel %vm1768, %v1755, %v1758
        %v1777 = vsel %vm1771, %v1764, 920167782
        %v1778 = vsel %vm1770, %v1761, %v1777
        %v1779 = vsel %vm1769, %v1776, %v1778
        %v1780 = vsel %vm1768, %v1758, %v1761
        %v1781 = vsel %vm1771, %v1767, 1326507024
        %v1782 = vsel %vm1770, %v1764, %v1781
        %v1783 = vsel %vm1769, %v1780, %v1782
        %v1784 = vshll.u32 %v1744, 8
        %v1785 = vmul.u32.u64.compose %v1784, %v1783
        %v1786 = vextract.low.u32 %v1785
        %v1787 = vextract.high.u32 %v1785
        %v1788 = vmul.u32.u64.compose %v1784, %v1779
        %v1789 = vextract.low.u32 %v1788
        %v1790 = vextract.high.u32 %v1788
        %v1791 = vmul.u32 %v1784, %v1775
        %v1792 = vadd.s32 %v1787, %v1789
        %vm1793 = vc.u32 %v1787, %v1789
        %v1794 = vadd.s32 %v1790, 1
        %v1795 = vsel %vm1793, %v1794, %v1790
        %v1796 = vadd.s32 %v1791, %v1795
        %v1797 = vadd.s32 %v1796, 536870912
        %v1798 = vshrl.u32 %v1797, 30
        %v1799 = vshll.u32 %v1798, 30
        %v1800 = vsub.s32 %v1796, %v1799
        %vm1801 = vcmp.lt.s32.totalorder %v1800, 0
        %v1802 = vsub.s32 0, %v1800
        %v1803 = vsel %vm1801, %v1802, %v1800
        %v1804 = vclz %v1803
        %v1805 = vsub.s32 %v1804, 2
        %vm1806 = vcmp.gt.s32.totalorder 0, %v1805
        %v1807 = vsel %vm1806, 0, %v1805
        %v1808 = vsub.s32 32, %v1807
        %v1809 = vshll.u32 %v1800, %v1807
        %v1810 = vshrl.u32 %v1792, %v1808
        %v1811 = vor.u32 %v1809, %v1810
        %v1812 = vsub.s32 4294967266, %v1807
        %v1813 = vadd.s32 %v1812, 127
        %v1814 = vshll.u32 %v1813, 23
        %v1815 = vor.u32 4788187, %v1814
        %v1816 = vand.u32 2147483647, %v1815
        %v1818 = vcvt.s32.f32 %v1811
        %v1819 = vmul.f32 %v1818, %v1816
        %v1820 = vxor.u32 %v1819, 2147483648
        %v1821 = vsel %vm1738, %v1820, %v1819
        %v1822 = vsub.s32 4, %v1798
        %v1823 = vsel %vm1738, %v1822, %v1798
        %v1824 = vsel %vm1737, %v470, %v1821
        %v1825 = vsel %vm1737, 0, %v1823
        %v1826 = vcosq.f32.pop %v1824
        %v1827 = vsinq.f32.pop %v1824
        %vm1828 = vweird.f32 %v470
        %v1829 = vand.u32 %v1825, 3
        %vm1830 = vcmp.lt.s32.totalorder %v1829, 2
        %vm1831 = vcmp.eq.s32.totalorder %v1829, 0
        %v1832 = vxor.u32 %v1827, 2147483648
        %v1833 = vsel %vm1831, %v1826, %v1832
        %vm1834 = vcmp.eq.s32.totalorder %v1829, 2
        %v1835 = vxor.u32 %v1826, 2147483648
        %v1836 = vsel %vm1834, %v1835, %v1827
        %v1837 = vsel %vm1830, %v1833, %v1836
        %v1838 = vsel %vm1828, nan, %v1837
        %v1839 = vand.u32 2147483647, %v473
        %vm1840 = vcmp.le.f32.partialorder %v1839, 0.7853982
        %vm1841 = vcmp.lt.s32.totalorder %v473, 0
        %v1842 = vand.u32 %v473, 2139095040
        %v1843 = vshrl.u32 %v1842, 23
        %v1844 = vsub.s32 %v1843, 127
        %v1845 = vand.u32 2147483647, %v473
        %v1846 = vand.u32 %v1845, 8388607
        %v1847 = vor.u32 %v1846, 8388608
        %v1848 = vsub.s32 0, %v1847
        %v1849 = vadd.s32 %v1844, 1
        %vm1850 = vcmp.gt.s32.totalorder %v1849, 0
        %v1851 = vsel %vm1850, %v1849, 0
        %v1852 = vshrl.u32 %v1851, 5
        %v1853 = vand.u32 %v1851, 31
        %v1854 = vsub.s32 32, %v1853
        %v1855 = vshrl.u32 683565275, %v1854
        %v1856 = vshll.u32 683565275, %v1853
        %v1857 = vshrl.u32 2475754826, %v1854
        %v1858 = vor.u32 %v1856, %v1857
        %v1859 = vshll.u32 2475754826, %v1853
        %v1860 = vshrl.u32 2131351028, %v1854
        %v1861 = vor.u32 %v1859, %v1860
        %v1862 = vshll.u32 2131351028, %v1853
        %v1863 = vshrl.u32 2102212464, %v1854
        %v1864 = vor.u32 %v1862, %v1863
        %v1865 = vshll.u32 2102212464, %v1853
        %v1866 = vshrl.u32 920167782, %v1854
        %v1867 = vor.u32 %v1865, %v1866
        %v1868 = vshll.u32 920167782, %v1853
        %v1869 = vshrl.u32 1326507024, %v1854
        %v1870 = vor.u32 %v1868, %v1869
        %vm1871 = vcmp.lt.s32.totalorder %v1852, 1
        %vm1872 = vcmp.lt.s32.totalorder %v1852, 2
        %vm1873 = vcmp.lt.s32.totalorder %v1852, 3
        %vm1874 = vcmp.lt.s32.totalorder %v1852, 4
        %v1875 = vsel %vm1871, %v1855, %v1858
        %v1876 = vsel %vm1874, %v1864, 2102212464
        %v1877 = vsel %vm1873, %v1861, %v1876
        %v1878 = vsel %vm1872, %v1875, %v1877
        %v1879 = vsel %vm1871, %v1858, %v1861
        %v1880 = vsel %vm1874, %v1867, 920167782
        %v1881 = vsel %vm1873, %v1864, %v1880
        %v1882 = vsel %vm1872, %v1879, %v1881
        %v1883 = vsel %vm1871, %v1861, %v1864
        %v1884 = vsel %vm1874, %v1870, 1326507024
        %v1885 = vsel %vm1873, %v1867, %v1884
        %v1886 = vsel %vm1872, %v1883, %v1885
        %v1887 = vshll.u32 %v1847, 8
        %v1888 = vmul.u32.u64.compose %v1887, %v1886
        %v1889 = vextract.low.u32 %v1888
        %v1890 = vextract.high.u32 %v1888
        %v1891 = vmul.u32.u64.compose %v1887, %v1882
        %v1892 = vextract.low.u32 %v1891
        %v1893 = vextract.high.u32 %v1891
        %v1894 = vmul.u32 %v1887, %v1878
        %v1895 = vadd.s32 %v1890, %v1892
        %vm1896 = vc.u32 %v1890, %v1892
        %v1897 = vadd.s32 %v1893, 1
        %v1898 = vsel %vm1896, %v1897, %v1893
        %v1899 = vadd.s32 %v1894, %v1898
        %v1900 = vadd.s32 %v1899, 536870912
        %v1901 = vshrl.u32 %v1900, 30
        %v1902 = vshll.u32 %v1901, 30
        %v1903 = vsub.s32 %v1899, %v1902
        %vm1904 = vcmp.lt.s32.totalorder %v1903, 0
        %v1905 = vsub.s32 0, %v1903
        %v1906 = vsel %vm1904, %v1905, %v1903
        %v1907 = vclz %v1906
        %v1908 = vsub.s32 %v1907, 2
        %vm1909 = vcmp.gt.s32.totalorder 0, %v1908
        %v1910 = vsel %vm1909, 0, %v1908
        %v1911 = vsub.s32 32, %v1910
        %v1912 = vshll.u32 %v1903, %v1910
        %v1913 = vshrl.u32 %v1895, %v1911
        %v1914 = vor.u32 %v1912, %v1913
        %v1915 = vsub.s32 4294967266, %v1910
        %v1916 = vadd.s32 %v1915, 127
        %v1917 = vshll.u32 %v1916, 23
        %v1918 = vor.u32 4788187, %v1917
        %v1919 = vand.u32 2147483647, %v1918
        %v1921 = vcvt.s32.f32 %v1914
        %v1922 = vmul.f32 %v1921, %v1919
        %v1923 = vxor.u32 %v1922, 2147483648
        %v1924 = vsel %vm1841, %v1923, %v1922
        %v1925 = vsub.s32 4, %v1901
        %v1926 = vsel %vm1841, %v1925, %v1901
        %v1927 = vsel %vm1840, %v473, %v1924
        %v1928 = vsel %vm1840, 0, %v1926
        %v1929 = vcosq.f32.pop %v1927
        %v1930 = vsinq.f32.pop %v1927
        %vm1931 = vweird.f32 %v473
        %v1932 = vand.u32 %v1928, 3
        %vm1933 = vcmp.lt.s32.totalorder %v1932, 2
        %vm1934 = vcmp.eq.s32.totalorder %v1932, 0
        %v1935 = vxor.u32 %v1930, 2147483648
        %v1936 = vsel %vm1934, %v1929, %v1935
        %vm1937 = vcmp.eq.s32.totalorder %v1932, 2
        %v1938 = vxor.u32 %v1929, 2147483648
        %v1939 = vsel %vm1937, %v1938, %v1930
        %v1940 = vsel %vm1933, %v1936, %v1939
        %v1941 = vsel %vm1931, nan, %v1940
        %v1942 = vand.u32 2147483647, %v478
        %vm1943 = vcmp.le.f32.partialorder %v1942, 0.7853982
        %vm1944 = vcmp.lt.s32.totalorder %v478, 0
        %v1945 = vand.u32 %v478, 2139095040
        %v1946 = vshrl.u32 %v1945, 23
        %v1947 = vsub.s32 %v1946, 127
        %v1948 = vand.u32 2147483647, %v478
        %v1949 = vand.u32 %v1948, 8388607
        %v1950 = vor.u32 %v1949, 8388608
        %v1951 = vsub.s32 0, %v1950
        %v1952 = vadd.s32 %v1947, 1
        %vm1953 = vcmp.gt.s32.totalorder %v1952, 0
        %v1954 = vsel %vm1953, %v1952, 0
        %v1955 = vshrl.u32 %v1954, 5
        %v1956 = vand.u32 %v1954, 31
        %v1957 = vsub.s32 32, %v1956
        %v1958 = vshrl.u32 683565275, %v1957
        %v1959 = vshll.u32 683565275, %v1956
        %v1960 = vshrl.u32 2475754826, %v1957
        %v1961 = vor.u32 %v1959, %v1960
        %v1962 = vshll.u32 2475754826, %v1956
        %v1963 = vshrl.u32 2131351028, %v1957
        %v1964 = vor.u32 %v1962, %v1963
        %v1965 = vshll.u32 2131351028, %v1956
        %v1966 = vshrl.u32 2102212464, %v1957
        %v1967 = vor.u32 %v1965, %v1966
        %v1968 = vshll.u32 2102212464, %v1956
        %v1969 = vshrl.u32 920167782, %v1957
        %v1970 = vor.u32 %v1968, %v1969
        %v1971 = vshll.u32 920167782, %v1956
        %v1972 = vshrl.u32 1326507024, %v1957
        %v1973 = vor.u32 %v1971, %v1972
        %vm1974 = vcmp.lt.s32.totalorder %v1955, 1
        %vm1975 = vcmp.lt.s32.totalorder %v1955, 2
        %vm1976 = vcmp.lt.s32.totalorder %v1955, 3
        %vm1977 = vcmp.lt.s32.totalorder %v1955, 4
        %v1978 = vsel %vm1974, %v1958, %v1961
        %v1979 = vsel %vm1977, %v1967, 2102212464
        %v1980 = vsel %vm1976, %v1964, %v1979
        %v1981 = vsel %vm1975, %v1978, %v1980
        %v1982 = vsel %vm1974, %v1961, %v1964
        %v1983 = vsel %vm1977, %v1970, 920167782
        %v1984 = vsel %vm1976, %v1967, %v1983
        %v1985 = vsel %vm1975, %v1982, %v1984
        %v1986 = vsel %vm1974, %v1964, %v1967
        %v1987 = vsel %vm1977, %v1973, 1326507024
        %v1988 = vsel %vm1976, %v1970, %v1987
        %v1989 = vsel %vm1975, %v1986, %v1988
        %v1990 = vshll.u32 %v1950, 8
        %v1991 = vmul.u32.u64.compose %v1990, %v1989
        %v1992 = vextract.low.u32 %v1991
        %v1993 = vextract.high.u32 %v1991
        %v1994 = vmul.u32.u64.compose %v1990, %v1985
        %v1995 = vextract.low.u32 %v1994
        %v1996 = vextract.high.u32 %v1994
        %v1997 = vmul.u32 %v1990, %v1981
        %v1998 = vadd.s32 %v1993, %v1995
        %vm1999 = vc.u32 %v1993, %v1995
        %v2000 = vadd.s32 %v1996, 1
        %v2001 = vsel %vm1999, %v2000, %v1996
        %v2002 = vadd.s32 %v1997, %v2001
        %v2003 = vadd.s32 %v2002, 536870912
        %v2004 = vshrl.u32 %v2003, 30
        %v2005 = vshll.u32 %v2004, 30
        %v2006 = vsub.s32 %v2002, %v2005
        %vm2007 = vcmp.lt.s32.totalorder %v2006, 0
        %v2008 = vsub.s32 0, %v2006
        %v2009 = vsel %vm2007, %v2008, %v2006
        %v2010 = vclz %v2009
        %v2011 = vsub.s32 %v2010, 2
        %vm2012 = vcmp.gt.s32.totalorder 0, %v2011
        %v2013 = vsel %vm2012, 0, %v2011
        %v2014 = vsub.s32 32, %v2013
        %v2015 = vshll.u32 %v2006, %v2013
        %v2016 = vshrl.u32 %v1998, %v2014
        %v2017 = vor.u32 %v2015, %v2016
        %v2018 = vsub.s32 4294967266, %v2013
        %v2019 = vadd.s32 %v2018, 127
        %v2020 = vshll.u32 %v2019, 23
        %v2021 = vor.u32 4788187, %v2020
        %v2022 = vand.u32 2147483647, %v2021
        %v2024 = vcvt.s32.f32 %v2017
        %v2025 = vmul.f32 %v2024, %v2022
        %v2026 = vxor.u32 %v2025, 2147483648
        %v2027 = vsel %vm1944, %v2026, %v2025
        %v2028 = vsub.s32 4, %v2004
        %v2029 = vsel %vm1944, %v2028, %v2004
        %v2030 = vsel %vm1943, %v478, %v2027
        %v2031 = vsel %vm1943, 0, %v2029
        %v2032 = vcosq.f32.pop %v2030
        %v2033 = vsinq.f32.pop %v2030
        %vm2034 = vweird.f32 %v478
        %v2035 = vand.u32 %v2031, 3
        %vm2036 = vcmp.lt.s32.totalorder %v2035, 2
        %vm2037 = vcmp.eq.s32.totalorder %v2035, 0
        %v2038 = vxor.u32 %v2033, 2147483648
        %v2039 = vsel %vm2037, %v2032, %v2038
        %vm2040 = vcmp.eq.s32.totalorder %v2035, 2
        %v2041 = vxor.u32 %v2032, 2147483648
        %v2042 = vsel %vm2040, %v2041, %v2033
        %v2043 = vsel %vm2036, %v2039, %v2042
        %v2044 = vsel %vm2034, nan, %v2043
        %v2045 = vand.u32 2147483647, %v481
        %vm2046 = vcmp.le.f32.partialorder %v2045, 0.7853982
        %vm2047 = vcmp.lt.s32.totalorder %v481, 0
        %v2048 = vand.u32 %v481, 2139095040
        %v2049 = vshrl.u32 %v2048, 23
        %v2050 = vsub.s32 %v2049, 127
        %v2051 = vand.u32 2147483647, %v481
        %v2052 = vand.u32 %v2051, 8388607
        %v2053 = vor.u32 %v2052, 8388608
        %v2054 = vsub.s32 0, %v2053
        %v2055 = vadd.s32 %v2050, 1
        %vm2056 = vcmp.gt.s32.totalorder %v2055, 0
        %v2057 = vsel %vm2056, %v2055, 0
        %v2058 = vshrl.u32 %v2057, 5
        %v2059 = vand.u32 %v2057, 31
        %v2060 = vsub.s32 32, %v2059
        %v2061 = vshrl.u32 683565275, %v2060
        %v2062 = vshll.u32 683565275, %v2059
        %v2063 = vshrl.u32 2475754826, %v2060
        %v2064 = vor.u32 %v2062, %v2063
        %v2065 = vshll.u32 2475754826, %v2059
        %v2066 = vshrl.u32 2131351028, %v2060
        %v2067 = vor.u32 %v2065, %v2066
        %v2068 = vshll.u32 2131351028, %v2059
        %v2069 = vshrl.u32 2102212464, %v2060
        %v2070 = vor.u32 %v2068, %v2069
        %v2071 = vshll.u32 2102212464, %v2059
        %v2072 = vshrl.u32 920167782, %v2060
        %v2073 = vor.u32 %v2071, %v2072
        %v2074 = vshll.u32 920167782, %v2059
        %v2075 = vshrl.u32 1326507024, %v2060
        %v2076 = vor.u32 %v2074, %v2075
        %vm2077 = vcmp.lt.s32.totalorder %v2058, 1
        %vm2078 = vcmp.lt.s32.totalorder %v2058, 2
        %vm2079 = vcmp.lt.s32.totalorder %v2058, 3
        %vm2080 = vcmp.lt.s32.totalorder %v2058, 4
        %v2081 = vsel %vm2077, %v2061, %v2064
        %v2082 = vsel %vm2080, %v2070, 2102212464
        %v2083 = vsel %vm2079, %v2067, %v2082
        %v2084 = vsel %vm2078, %v2081, %v2083
        %v2085 = vsel %vm2077, %v2064, %v2067
        %v2086 = vsel %vm2080, %v2073, 920167782
        %v2087 = vsel %vm2079, %v2070, %v2086
        %v2088 = vsel %vm2078, %v2085, %v2087
        %v2089 = vsel %vm2077, %v2067, %v2070
        %v2090 = vsel %vm2080, %v2076, 1326507024
        %v2091 = vsel %vm2079, %v2073, %v2090
        %v2092 = vsel %vm2078, %v2089, %v2091
        %v2093 = vshll.u32 %v2053, 8
        %v2094 = vmul.u32.u64.compose %v2093, %v2092
        %v2095 = vextract.low.u32 %v2094
        %v2096 = vextract.high.u32 %v2094
        %v2097 = vmul.u32.u64.compose %v2093, %v2088
        %v2098 = vextract.low.u32 %v2097
        %v2099 = vextract.high.u32 %v2097
        %v2100 = vmul.u32 %v2093, %v2084
        %v2101 = vadd.s32 %v2096, %v2098
        %vm2102 = vc.u32 %v2096, %v2098
        %v2103 = vadd.s32 %v2099, 1
        %v2104 = vsel %vm2102, %v2103, %v2099
        %v2105 = vadd.s32 %v2100, %v2104
        %v2106 = vadd.s32 %v2105, 536870912
        %v2107 = vshrl.u32 %v2106, 30
        %v2108 = vshll.u32 %v2107, 30
        %v2109 = vsub.s32 %v2105, %v2108
        %vm2110 = vcmp.lt.s32.totalorder %v2109, 0
        %v2111 = vsub.s32 0, %v2109
        %v2112 = vsel %vm2110, %v2111, %v2109
        %v2113 = vclz %v2112
        %v2114 = vsub.s32 %v2113, 2
        %vm2115 = vcmp.gt.s32.totalorder 0, %v2114
        %v2116 = vsel %vm2115, 0, %v2114
        %v2117 = vsub.s32 32, %v2116
        %v2118 = vshll.u32 %v2109, %v2116
        %v2119 = vshrl.u32 %v2101, %v2117
        %v2120 = vor.u32 %v2118, %v2119
        %v2121 = vsub.s32 4294967266, %v2116
        %v2122 = vadd.s32 %v2121, 127
        %v2123 = vshll.u32 %v2122, 23
        %v2124 = vor.u32 4788187, %v2123
        %v2125 = vand.u32 2147483647, %v2124
        %v2127 = vcvt.s32.f32 %v2120
        %v2128 = vmul.f32 %v2127, %v2125
        %v2129 = vxor.u32 %v2128, 2147483648
        %v2130 = vsel %vm2047, %v2129, %v2128
        %v2131 = vsub.s32 4, %v2107
        %v2132 = vsel %vm2047, %v2131, %v2107
        %v2133 = vsel %vm2046, %v481, %v2130
        %v2134 = vsel %vm2046, 0, %v2132
        %v2135 = vcosq.f32.pop %v2133
        %v2136 = vsinq.f32.pop %v2133
        %vm2137 = vweird.f32 %v481
        %v2138 = vand.u32 %v2134, 3
        %vm2139 = vcmp.lt.s32.totalorder %v2138, 2
        %vm2140 = vcmp.eq.s32.totalorder %v2138, 0
        %v2141 = vxor.u32 %v2136, 2147483648
        %v2142 = vsel %vm2140, %v2135, %v2141
        %vm2143 = vcmp.eq.s32.totalorder %v2138, 2
        %v2144 = vxor.u32 %v2135, 2147483648
        %v2145 = vsel %vm2143, %v2144, %v2136
        %v2146 = vsel %vm2139, %v2142, %v2145
        %v2147 = vsel %vm2137, nan, %v2146
        %v2148 = vld [vmem:[%s3] sm:$0xff]
        %v2149 = vld [vmem:[%s3 + $0x8] sm:$0xff]
        %v2150 = vld [vmem:[%s3 + $0x10] sm:$0xff]
        %v2151 = vld [vmem:[%s3 + $0x18] sm:$0xff]
        %v2152 = vpack.c.bf16 %v457, %v454
        %v2153 = vpack.c.bf16 %v465, %v462
        %v2154 = vpack.c.bf16 %v473, %v470
        %v2155 = vpack.c.bf16 %v481, %v478
        %v2156 = vpack.c.bf16 %v485, %v484
        %v2157 = vpack.c.bf16 %v487, %v486
        %v2158 = vpack.c.bf16 %v489, %v488
        %v2159 = vpack.c.bf16 %v491, %v490
        %v2160 = vpack.c.bf16 %v699, %v595
        %v2161 = vpack.c.bf16 %v907, %v803
        %v2162 = vpack.c.bf16 %v1115, %v1011
        %v2163 = vpack.c.bf16 %v1323, %v1219
        %v2164 = vpack.c.bf16 %v1529, %v1426
        %v2165 = vpack.c.bf16 %v1735, %v1632
        %v2166 = vpack.c.bf16 %v1941, %v1838
        %v2167 = vpack.c.bf16 %v2147, %v2044
        %v2168 = vld [vmem:[%s4] sm:$0xff]
        %v2169 = vld [vmem:[%s4 + $0x8] sm:$0xff]
        %v2170 = vld [vmem:[%s4 + $0x10] sm:$0xff]
        %v2171 = vld [vmem:[%s4 + $0x18] sm:$0xff]
        %2173 = vset.pattern.permute.xlu0 0
        %2174 = vperm.xlu0 %2173, %v2168
        %v2175 = vpop.permute.xlu0 %2174
        %2178 = vset.pattern.permute.xlu0 0
        %2179 = vperm.xlu0 %2178, %v2169
        %v2180 = vpop.permute.xlu0 %2179
        %2183 = vset.pattern.permute.xlu0 0
        %2184 = vperm.xlu0 %2183, %v2170
        %v2185 = vpop.permute.xlu0 %2184
        %2188 = vset.pattern.permute.xlu0 0
        %2189 = vperm.xlu0 %2188, %v2171
        %v2190 = vpop.permute.xlu0 %2189
        %v2196 = vunpack.c.l.b16 %v2148
        %v2197 = vunpack.c.h.b16 %v2148
        %v2198 = vunpack.c.l.b16 %v2149
        %v2199 = vunpack.c.h.b16 %v2149
        %v2200 = vunpack.c.l.b16 %v2150
        %v2201 = vunpack.c.h.b16 %v2150
        %v2202 = vunpack.c.l.b16 %v2151
        %v2203 = vunpack.c.h.b16 %v2151
        %v2204 = vpack.c.b16 %v2198, %v2196
        %v2205 = vpack.c.b16 %v2199, %v2197
        %v2206 = vpack.c.b16 %v2202, %v2200
        %v2207 = vpack.c.b16 %v2203, %v2201
        %2212 = vmatprep.subr.bf16.mxu0 0
        %2213 = vmatpush1.bf16.msra.mxu0 %v2152
        %2214 = vmatprep.subr.bf16.mxu0 0
        %2215 = vmatpush1.bf16.msra.mxu0 %v2153
        %2216 = vmatprep.subr.bf16.mxu0 0
        %2217 = vmatpush1.bf16.msra.mxu0 %v2154
        %2218 = vmatprep.subr.bf16.mxu0 0
        %2219 = vmatpush1.bf16.msra.mxu0 %v2155
        %2220 = vmatprep.subr.bf16.mxu0 0
        %2221 = vmatpush1.bf16.msra.mxu0 %v2156
        %2222 = vmatprep.subr.bf16.mxu0 0
        %2223 = vmatpush1.bf16.msra.mxu0 %v2157
        %2224 = vmatprep.subr.bf16.mxu0 0
        %2225 = vmatpush1.bf16.msra.mxu0 %v2158
        %2226 = vmatprep.subr.bf16.mxu0 0
        %2227 = vmatpush1.bf16.msra.mxu0 %v2159
        %2228 = vmatprep.subr.bf16.mxu0 0
        %2229 = vmatpush1.bf16.msra.mxu0 %v2160
        %2230 = vmatprep.subr.bf16.mxu0 0
        %2231 = vmatpush1.bf16.msra.mxu0 %v2161
        %2232 = vmatprep.subr.bf16.mxu0 0
        %2233 = vmatpush1.bf16.msra.mxu0 %v2162
        %2234 = vmatprep.subr.bf16.mxu0 0
        %2235 = vmatpush1.bf16.msra.mxu0 %v2163
        %2236 = vmatprep.subr.bf16.mxu0 0
        %2237 = vmatpush1.bf16.msra.mxu0 %v2164
        %2238 = vmatprep.subr.bf16.mxu0 0
        %2239 = vmatpush1.bf16.msra.mxu0 %v2165
        %2240 = vmatprep.subr.bf16.mxu0 0
        %2241 = vmatpush1.bf16.msra.mxu0 %v2166
        %2242 = vmatprep.subr.bf16.mxu0 0
        %2243 = vmatpush1.bf16.msra.mxu0 %v2167
        %2244 = vmatprep.mubr.bf16.mxu0 %v2205
        %2245 = vmatmul.mubr.bf16.gmra.mrb[0].mxu0 %v2204
        %v2246 = vpop.f32.mrb[0].mxu0
        %v2247 = vadd.f32 %v2175, %v2246
        %v2248 = vpop.f32.mrb[0].mxu0
        %v2249 = vpop.f32.mrb[0].mxu0
        %v2250 = vadd.f32 %v2180, %v2249
        %v2251 = vpop.f32.mrb[0].mxu0
        %2252 = vmatprep.mubr.bf16.mxu0 %v2207
        %2253 = vmatmul.mubr.bf16.gmra.mrb[0].mxu0 %v2206
        %v2254 = vpop.f32.mrb[0].mxu0
        %v2255 = vadd.f32 %v2185, %v2254
        %v2256 = vpop.f32.mrb[0].mxu0
        %v2257 = vpop.f32.mrb[0].mxu0
        %v2258 = vadd.f32 %v2190, %v2257
        %v2259 = vpop.f32.mrb[0].mxu0
        %2260 = vdwg.mxu0
        %v2261 = vmul.f32 %v2247, 0.5
        %v2262 = vmul.f32 %v2250, 0.5
        %v2263 = vmul.f32 %v2255, 0.5
        %v2264 = vmul.f32 %v2258, 0.5
        %v2265 = vtanh.pop %v2261
        %v2266 = vtanh.pop %v2262
        %v2267 = vtanh.pop %v2263
        %v2268 = vtanh.pop %v2264
        %v2269 = vadd.f32 %v2265, 1.0
        %v2270 = vadd.f32 %v2266, 1.0
        %v2271 = vadd.f32 %v2267, 1.0
        %v2272 = vadd.f32 %v2268, 1.0
        %v2273 = vmul.f32 %v2269, 0.5
        %v2274 = vmul.f32 %v2270, 0.5
        %v2275 = vmul.f32 %v2271, 0.5
        %v2276 = vmul.f32 %v2272, 0.5
        %v2277 = vld [vmem:[%s5] sm:$0xf]
        %v2278 = vld [vmem:[%s5 + $0x4] sm:$0xf]
        %v2279 = vpack.c.bf16 %v2274, %v2273
        %v2280 = vpack.c.bf16 %v2276, %v2275
        %v2281 = vld [vmem:[%s6] sm:$0xff]
        %v2282 = vld [vmem:[%s6 + $0x8] sm:$0xff]
        %2284 = vset.pattern.permute.xlu0 0
        %2285 = vperm.xlu0 %2284, %v2281
        %v2286 = vpop.permute.xlu0 %2285
        %2289 = vset.pattern.permute.xlu0 0
        %2290 = vperm.xlu0 %2289, %v2282
        %v2291 = vpop.permute.xlu0 %2290
        %v2295 = vunpack.c.l.b16 %v2277
        %v2296 = vunpack.c.l.b16 %v2278
        %v2297 = vpack.c.b16 %v2296, %v2295
        %v2299 = vsel %vm406, %v2297, 0
        %2301 = vmatprep.subr.bf16.mxu0 0
        %2302 = vmatpush1.bf16.msra.mxu0 %v2279
        %2303 = vmatprep.subr.bf16.mxu0 0
        %2304 = vmatpush1.bf16.msra.mxu0 %v2280
        %2305 = vmatprep.subr.bf16.mxu0 0
        %2306 = vmatpush1.bf16.msra.mxu0 0
        %2307 = vmatprep.subr.bf16.mxu0 0
        %2308 = vmatpush1.bf16.msra.mxu0 0
        %2309 = vmatprep.subr.bf16.mxu0 0
        %2310 = vmatpush1.bf16.msra.mxu0 0
        %2311 = vmatprep.subr.bf16.mxu0 0
        %2312 = vmatpush1.bf16.msra.mxu0 0
        %2313 = vmatprep.subr.bf16.mxu0 0
        %2314 = vmatpush1.bf16.msra.mxu0 0
        %2315 = vmatprep.subr.bf16.mxu0 0
        %2316 = vmatpush1.bf16.msra.mxu0 0
        %2317 = vmatprep.subr.bf16.mxu0 0
        %2318 = vmatpush1.bf16.msra.mxu0 0
        %2319 = vmatprep.subr.bf16.mxu0 0
        %2320 = vmatpush1.bf16.msra.mxu0 0
        %2321 = vmatprep.subr.bf16.mxu0 0
        %2322 = vmatpush1.bf16.msra.mxu0 0
        %2323 = vmatprep.subr.bf16.mxu0 0
        %2324 = vmatpush1.bf16.msra.mxu0 0
        %2325 = vmatprep.subr.bf16.mxu0 0
        %2326 = vmatpush1.bf16.msra.mxu0 0
        %2327 = vmatprep.subr.bf16.mxu0 0
        %2328 = vmatpush1.bf16.msra.mxu0 0
        %2329 = vmatprep.subr.bf16.mxu0 0
        %2330 = vmatpush1.bf16.msra.mxu0 0
        %2331 = vmatprep.subr.bf16.mxu0 0
        %2332 = vmatpush1.bf16.msra.mxu0 0
        %2333 = vmatprep.mubr.bf16.mxu0 0
        %2334 = vmatmul.mubr.bf16.gmra.mrb[0].mxu0 %v2299
        %v2335 = vpop.f32.mrb[0].mxu0
        %v2336 = vadd.f32 %v2286, %v2335
        %v2337 = vpop.f32.mrb[0].mxu0
        %v2338 = vpop.f32.mrb[0].mxu0
        %v2339 = vadd.f32 %v2291, %v2338
        %v2340 = vpop.f32.mrb[0].mxu0
        %2341 = vdwg.mxu0
        %v2342 = vmul.f32 %v2336, 0.5
        %v2343 = vmul.f32 %v2339, 0.5
        %v2344 = vtanh.pop %v2342
        %v2345 = vtanh.pop %v2343
        %v2346 = vadd.f32 %v2344, 1.0
        %v2347 = vadd.f32 %v2345, 1.0
        %v2348 = vmul.f32 %v2346, 0.5
        %v2349 = vmul.f32 %v2347, 0.5
        %2350 = vst [vmem:[%s322] sm:$0xff] %v2348
        %2351 = vst [vmem:[%s322 + $0x8] sm:$0xff] %v2349
        %s2352 = sand.u32 %s181, 1
        %s2353 = scalar_lea.sflag [#allocation4], %s2352
        %s2354 = sand.u32 %s181, 1
        %s2355 = smul.addr %s2354, 16
        %s2356 = scalar_lea.vmem [#allocation3], %s2355
        // Predicated region
        $region87: #{tpu_custom_call.1} parent=81 // pred_check
          %p2357 = pneg %p191
        $region88: #{tpu_custom_call.1} parent=81 // pred_check_branch
          %2359 = sbr.rel (%p2357) target = $region90
        $region89: #{tpu_custom_call.1} parent=81 // pred_region
          %s2361 = ssub.s32 256, 256
          %2362 = vsyncadd %s2353, %s2361
          %s2363 = smul.addr %s21, 128
          %s2364 = scalar_lea.hbm %s7, %s2363
          %s2365 = sshll.u32 %s2356, 4
          %s2366 = int_to_ptr.vmem [resolvable:$true] %s2365
          %2371 = dma.vmem_to_hbm [thread:$0]  %s2366, 256, %s2364, %s2353, 128, 512, 8
        $region90: #{tpu_custom_call.1} parent=81 // pred_fallthru
          _
      $region82: #{tpu_custom_call.1} parent=5 // pred_fallthru
        _
      %p2372 = scmp.le.s32.totalorder 2, %s16
      // Predicated region
      $region91: #{tpu_custom_call.1} parent=5 // pred_check
        %p2373 = pneg %p2372
      $region92: #{tpu_custom_call.1} parent=5 // pred_check_branch
        %2375 = sbr.rel (%p2373) target = $region94
      $region93: #{tpu_custom_call.1} parent=5 // pred_region
        %s2376 = ssub.s32 %s16, 2
        // Predicated region
        $region95: #{tpu_custom_call.1} parent=93 // pred_check
          %p2377 = pneg %p197
        $region96: #{tpu_custom_call.1} parent=93 // pred_check_branch
          %2379 = sbr.rel (%p2377) target = $region98
        $region97: #{tpu_custom_call.1} parent=93 // pred_region
          %s2380 = sand.u32 %s182, 1
          %s2381 = scalar_lea.sflag [#allocation4], %s2380
          %s2382 = sand.u32 %s182, 1
          %s2383 = smul.addr %s2382, 16
          %s2384 = scalar_lea.vmem [#allocation3], %s2383
          %2385 = dma.done %s2381, 256
        $region98: #{tpu_custom_call.1} parent=93 // pred_fallthru
          _
      $region94: #{tpu_custom_call.1} parent=5 // pred_fallthru
        _
    $region6: #{tpu_custom_call.1} parent=1 // loop_footer
      %s20 = sadd.s32 1, %s16
    $region7: #{tpu_custom_call.1} parent=1 // loop_footer_branch
      %15 = sbr.rel target = $region3
    $region8: #{tpu_custom_call.1} parent=1 // loop_exit
      _
    %2386 = vsyncpa [#allocation4], 1
    %s2387 = scalar_lea.sflag [#allocation4], 1
    %2388 = vsyncpa %s2387, 1

</llo_original>
